<compile_context>
chip_gen: v5e
topology: v5e:2x2
jax: 0.10.0
libtpu: 0.0.40
codegen_flags: <defaults>
</compile_context>

<pallas_src>
import functools
import math

import jax
import jax.numpy as jnp
from jax import lax
from jax.experimental import pallas as pl
from jax.experimental.pallas import tpu as pltpu


# ---------------------------------------------------------------------------
# Pass 1: key projection  k = x2 @ W^T + b   (computed exactly once)
# ---------------------------------------------------------------------------
def _key_proj_kernel(x2_ref, w_ref, b_ref, k_ref):
    # Contract x2's feature dim with W's "in" dim (dim 1): the MXU consumes the
    # torch-layout (out, in) weight directly via a transposed-RHS contraction —
    # the same pattern flash kernels use for q @ k^T (no wrapper-side W.T, and
    # no separate transpose pass; verify with pl.lower_as_mlir if in doubt).
    k = lax.dot_general(
        x2_ref[...], w_ref[...],
        dimension_numbers=(((1,), (1,)), ((), ())),
        preferred_element_type=jnp.float32)
    k_ref[...] = (k + b_ref[...]).astype(k_ref.dtype)


# ---------------------------------------------------------------------------
# Pass 2: flash-style attention with online softmax over key tiles
# ---------------------------------------------------------------------------
def _flash_attn_kernel(x1_ref, k_ref, v_ref, o_ref, m_ref, l_ref, acc_ref, *,
                       inv_scale, scale_queries, seq_len, block_k,
                       needs_kv_mask):
    kv_idx = pl.program_id(2)

    @pl.when(kv_idx == 0)
    def _init():
        m_ref[...] = jnp.full(m_ref.shape, -jnp.inf, dtype=m_ref.dtype)
        l_ref[...] = jnp.zeros(l_ref.shape, dtype=l_ref.dtype)
        acc_ref[...] = jnp.zeros(acc_ref.shape, dtype=acc_ref.dtype)

    q = x1_ref[0]                       # (tq, D)
    k = k_ref[0]                        # (tk, D)
    v = v_ref[0]                        # (tk, D)

    if scale_queries:                   # S >= D: tq*D multiplies instead of tq*S
        q = q * inv_scale

    # scores = q @ k^T  (transposed-RHS contraction -> straight to vmatmul)
    s = lax.dot_general(q, k, dimension_numbers=(((1,), (1,)), ((), ())),
                        preferred_element_type=jnp.float32)     # (tq, tk) f32
    if not scale_queries:
        s = s * inv_scale

    if needs_kv_mask:                   # masked tail of the last key tile
        col_pos = kv_idx * block_k + lax.broadcasted_iota(
            jnp.int32, (1, block_k), 1)
        s = jnp.where(col_pos < seq_len, s, -jnp.inf)
        row_pos = kv_idx * block_k + lax.broadcasted_iota(
            jnp.int32, (block_k, 1), 0)
        v = jnp.where(row_pos < seq_len, v, 0.0)   # kill padded-value garbage

    m_prev = m_ref[...]
    m_new = jnp.maximum(m_prev, s.max(axis=-1, keepdims=True))
    alpha = jnp.exp(m_prev - m_new)
    p = jnp.exp(s - m_new)
    l_ref[...] = alpha * l_ref[...] + p.sum(axis=-1, keepdims=True)
    acc_ref[...] = alpha * acc_ref[...] + lax.dot_general(
        p.astype(v.dtype), v, dimension_numbers=(((1,), (0,)), ((), ())),
        preferred_element_type=jnp.float32)
    m_ref[...] = m_new

    @pl.when(kv_idx == pl.num_programs(2) - 1)
    def _finalize():
        # TODO(synk): dropout(p=0.1) is identity here (eval mode); torch
        # train-mode RNG is not reproducible in-kernel.
        inv_l = pl.reciprocal(l_ref[...], approx=True)       # EUP slot, ~free
        o_ref[0] = (acc_ref[...] * inv_l).astype(o_ref.dtype)


# ---------------------------------------------------------------------------
# Wrapper
# ---------------------------------------------------------------------------
def _tpu_vmem_capacity_bytes():
    try:
        return int(pltpu.get_tpu_info().vmem_capacity_bytes)
    except Exception:
        return 64 * 1024 * 1024        # conservative (v7x-sized) fallback


def _pick_tile(extent, cap):
    """Largest legal tile <= cap: the full extent, an evenly dividing
    128-multiple, or a cdiv-tiled 256 block with a masked tail.
    Never returns an unbounded full-S block for extents beyond the cap."""
    if extent <= cap:
        return extent                  # block == full dim is always legal
    for t in (512, 384, 256, 128):
        if t <= cap and extent % t == 0:
            return t
    return min(cap, 256)


def attention_model(x1, x2, x3, w_key, b_key, d_model, *, matmul_dtype=None):
    """x1,x2,x3: (B,S,D). w_key: torch layout (out,in)=(D,D). b_key: (D,).

    matmul_dtype=jnp.bfloat16 casts W and the activations to bf16 HBM-side
    (halves the dominant weight/activation DMA on all generations); MXU
    accumulation and softmax math stay f32. Leave None for bit-tight f32.
    """
    B, S, D = x1.shape
    assert x2.shape == (B, S, D) and x3.shape == (B, S, D)
    assert w_key.shape == (D, D) and b_key.shape == (D,)

    # NOTE: the torch module declares nn.Linear(d_v, d_k) with
    # d_v = d_k = sqrt(d_model) = 32, which cannot consume x2[..., 1024]; the
    # shape-consistent reading (used here and by the reference) is D -> D.
    d_k = math.sqrt(d_model)
    inv_scale = 1.0 / math.sqrt(math.sqrt(d_k))          # == d_model ** (-1/8)

    if matmul_dtype is not None:       # HBM-side cast (perf feedback #4)
        x1 = x1.astype(matmul_dtype)
        x2 = x2.astype(matmul_dtype)
        x3 = x3.astype(matmul_dtype)
        w = jnp.asarray(w_key).astype(matmul_dtype)
        k_dtype = matmul_dtype
    else:
        w = jnp.asarray(w_key)
        k_dtype = jnp.float32
    b2d = jnp.asarray(b_key).astype(jnp.float32).reshape(1, D)   # 2-D for VMEM

    # Generation-aware VMEM budget / tile caps (v5e/v6e 128 MiB, v7x 64 MiB).
    vmem_cap = _tpu_vmem_capacity_bytes()
    vmem_limit = int(min(max(32 * 1024 * 1024, (vmem_cap * 3) // 4),
                         112 * 1024 * 1024))
    tile_cap = 512 if vmem_cap >= 96 * 1024 * 1024 else 256

    # ---- Pass 1: key projection, computed exactly once (not per q tile). ----
    rows = B * S
    tr = _pick_tile(rows, tile_cap)
    k_flat = pl.pallas_call(
        _key_proj_kernel,
        out_shape=jax.ShapeDtypeStruct((rows, D), k_dtype),
        grid_spec=pltpu.PrefetchScalarGridSpec(
            num_scalar_prefetch=0,
            grid=(pl.cdiv(rows, tr),),
            in_specs=[
                pl.BlockSpec((tr, D), lambda r: (r, 0)),   # x2 rows
                pl.BlockSpec((D, D), lambda r: (0, 0)),    # W (out, in)
                pl.BlockSpec((1, D), lambda r: (0, 0)),    # bias
            ],
            out_specs=pl.BlockSpec((tr, D), lambda r: (r, 0)),
        ),
        compiler_params=pltpu.CompilerParams(
            dimension_semantics=("parallel",),
            vmem_limit_bytes=vmem_limit),
    )(x2.reshape(rows, D), w, b2d)
    k = k_flat.reshape(B, S, D)

    # ---- Pass 2: flash attention over (batch, q tiles, kv tiles). ----------
    tq = _pick_tile(S, tile_cap)
    tk = _pick_tile(S, tile_cap)
    n_q = pl.cdiv(S, tq)
    n_kv = pl.cdiv(S, tk)

    kernel = functools.partial(
        _flash_attn_kernel,
        inv_scale=inv_scale,
        scale_queries=(S >= D),
        seq_len=S,
        block_k=tk,
        needs_kv_mask=(n_kv * tk != S))

    return pl.pallas_call(
        kernel,
        out_shape=jax.ShapeDtypeStruct((B, S, D), jnp.float32),
        grid_spec=pltpu.PrefetchScalarGridSpec(
            num_scalar_prefetch=0,
            grid=(B, n_q, n_kv),
            in_specs=[
                pl.BlockSpec((1, tq, D), lambda b, q, kv: (b, q, 0)),   # x1
                pl.BlockSpec((1, tk, D), lambda b, q, kv: (b, kv, 0)),  # k
                pl.BlockSpec((1, tk, D), lambda b, q, kv: (b, kv, 0)),  # x3
            ],
            out_specs=pl.BlockSpec((1, tq, D), lambda b, q, kv: (b, q, 0)),
            scratch_shapes=[
                pltpu.VMEM((tq, 1), jnp.float32),      # running max
                pltpu.VMEM((tq, 1), jnp.float32),      # running denominator
                pltpu.VMEM((tq, D), jnp.float32),      # output accumulator
            ],
        ),
        compiler_params=pltpu.CompilerParams(
            # batch & q tiles split across cores; kv is the reduction axis.
            dimension_semantics=("parallel", "parallel", "arbitrary"),
            vmem_limit_bytes=vmem_limit),
    )(x1, k, x3)


def _reference(x1, x2, x3, w_key, b_key, d_model):
    k = x2 @ w_key.T + b_key
    dot = jnp.einsum("bsd,btd->bst", x1, k)
    scaled = dot * (1.0 / math.sqrt(math.sqrt(math.sqrt(d_model))))
    sm = jax.nn.softmax(scaled, axis=-1)
    return jnp.einsum("bst,btd->bsd", sm, x3)


if __name__ == "__main__":
    # Shapes taken directly from the module spec: x = (1, 4, 1024), d_model=1024.
    d_model = 1024
    B, S, D = 1, 4, d_model
    key = jax.random.PRNGKey(0)
    k1, k2, k3, kw, kb = jax.random.split(key, 5)
    x1 = jax.random.normal(k1, (B, S, D), dtype=jnp.float32)
    x2 = jax.random.normal(k2, (B, S, D), dtype=jnp.float32)
    x3 = jax.random.normal(k3, (B, S, D), dtype=jnp.float32)
    # Deterministic Linear params (torch layout: weight (out, in), bias (out,))
    w_key = jax.random.normal(kw, (D, D), dtype=jnp.float32) / math.sqrt(D)
    b_key = jax.random.normal(kb, (D,), dtype=jnp.float32) * 0.01

    # 1) Spec shape, full-f32 path: tight check vs the reference.
    out = jax.block_until_ready(attention_model(x1, x2, x3, w_key, b_key, d_model))
    ref = _reference(x1, x2, x3, w_key, b_key, d_model)
    assert out.shape == (B, S, D)
    assert jnp.allclose(out, ref, atol=2e-3, rtol=2e-3), "f32 mismatch vs reference"

    # 2) Spec shape, HBM-side-bf16 operand path (halves the dominant weight
    #    DMA): sanity check with a tolerance matching bf16 operand rounding
    #    amplified through the softmax.
    out_bf16 = jax.block_until_ready(
        attention_model(x1, x2, x3, w_key, b_key, d_model,
                        matmul_dtype=jnp.bfloat16))
    assert jnp.allclose(out_bf16, ref, atol=2e-1, rtol=2e-1), "bf16 path mismatch"

    # 3) Larger, non-128-multiple sequence: exercises q/kv tiling, the masked
    #    key tail, the hoisted key projection, and the batch-parallel axis.
    B2, S2 = 2, 576
    kk1, kk2, kk3 = jax.random.split(jax.random.PRNGKey(1), 3)
    y1 = jax.random.normal(kk1, (B2, S2, D), dtype=jnp.float32)
    y2 = jax.random.normal(kk2, (B2, S2, D), dtype=jnp.float32)
    y3 = jax.random.normal(kk3, (B2, S2, D), dtype=jnp.float32)
    out2 = jax.block_until_ready(attention_model(y1, y2, y3, w_key, b_key, d_model))
    ref2 = _reference(y1, y2, y3, w_key, b_key, d_model)
    # Slightly looser: near-tied softmax rows at S=576 amplify tiny matmul
    # precision differences between the kernel and the XLA reference.
    assert jnp.allclose(out2, ref2, atol=2e-2, rtol=2e-2), "tiled-path mismatch"

    print("KERNEL_OK")
</pallas_src>

<mosaic_0001>
module attributes {stable_mosaic.version = 11 : i64} {
  func.func @_key_proj_kernel(%arg0: i32, %arg1: memref<4x1024xf32, #tpu.memory_space<vmem>>, %arg2: memref<1024x1024xf32, #tpu.memory_space<vmem>>, %arg3: memref<1x1024xf32, #tpu.memory_space<vmem>>, %arg4: memref<4x1024xf32, #tpu.memory_space<vmem>>) attributes {dimension_semantics = [#tpu.dimension_semantics<parallel>], iteration_bounds = array<i64: 1>, scalar_prefetch = 0 : i64, scratch_operands = 0 : i64, tpu.core_type = #tpu.core_type<tc>, window_params = [{transform_indices = @transform_0, window_bounds = array<i64: 4, 1024>}, {pipeline_mode = #tpu.pipeline_mode<synchronous>, transform_indices = @transform_1, window_bounds = array<i64: 1024, 1024>}, {pipeline_mode = #tpu.pipeline_mode<synchronous>, transform_indices = @transform_2, window_bounds = array<i64: 1, 1024>}, {transform_indices = @transform_3, window_bounds = array<i64: 4, 1024>}]} {
    %c0 = arith.constant 0 : index
    %c0_0 = arith.constant 0 : index
    %0 = vector.load %arg1[%c0, %c0_0] : memref<4x1024xf32, #tpu.memory_space<vmem>>, vector<4x1024xf32>
    %c0_1 = arith.constant 0 : index
    %c0_2 = arith.constant 0 : index
    %1 = vector.load %arg2[%c0_1, %c0_2] : memref<1024x1024xf32, #tpu.memory_space<vmem>>, vector<1024x1024xf32>
    %cst = arith.constant dense<0.000000e+00> : vector<4x1024xf32>
    %2 = tpu.matmul %0, %1, %cst {dimension_numbers = #tpu.dot_dimension_numbers<[1], [1], [0], [0], [0, 0, 1, 0], [], []>} : vector<4x1024xf32>, vector<1024x1024xf32>, vector<4x1024xf32> -> vector<4x1024xf32>
    %c0_3 = arith.constant 0 : index
    %c0_4 = arith.constant 0 : index
    %3 = vector.load %arg3[%c0_3, %c0_4] : memref<1x1024xf32, #tpu.memory_space<vmem>>, vector<1x1024xf32>
    %4 = vector.broadcast %3 : vector<1x1024xf32> to vector<4x1024xf32>
    %5 = arith.addf %2, %4 : vector<4x1024xf32>
    %c0_5 = arith.constant 0 : index
    %c0_6 = arith.constant 0 : index
    %6 = vector.load %arg4[%c0_5, %c0_6] : memref<4x1024xf32, #tpu.memory_space<vmem>>, vector<4x1024xf32>
    tpu.vector_store %arg4[%c0_5, %c0_6], %5 {strides = array<i32>} : memref<4x1024xf32, #tpu.memory_space<vmem>>, vector<4x1024xf32>,
    return
  }
  func.func @transform_0(%arg0: i32) -> (i32, i32) {
    %c0_i32 = arith.constant 0 : i32
    %c0_i32_0 = arith.constant 0 : i32
    return %arg0, %c0_i32 : i32, i32
  }
  func.func @transform_1(%arg0: i32) -> (i32, i32) {
    %c0_i32 = arith.constant 0 : i32
    %c0_i32_0 = arith.constant 0 : i32
    %c0_i32_1 = arith.constant 0 : i32
    return %c0_i32, %c0_i32_0 : i32, i32
  }
  func.func @transform_2(%arg0: i32) -> (i32, i32) {
    %c0_i32 = arith.constant 0 : i32
    %c0_i32_0 = arith.constant 0 : i32
    %c0_i32_1 = arith.constant 0 : i32
    return %c0_i32, %c0_i32_0 : i32, i32
  }
  func.func @transform_3(%arg0: i32) -> (i32, i32) {
    %c0_i32 = arith.constant 0 : i32
    %c0_i32_0 = arith.constant 0 : i32
    return %arg0, %c0_i32 : i32, i32
  }
}

</mosaic_0001>

<llo_original>
// kernel: tpu_custom_call.1
$region0: #{tpu_custom_call.1}
  #allocation0 [shape = 'u32[]', space=smem, size = 0x4, offset = 0x4, fixed_abs, tag = 'smem constant byte address 0x4 - core index']
  #allocation1 [shape = 'u32[72,128]{1,0:T(1,128)}', space=vmem, size = 0x9000, scoped, tag = 'internal scratch']
  %s0 = inlined_call_operand.hbm [shape: f32[4,1024], index: 0, kind: input, shape index: {}]
  %s1 = inlined_call_operand.hbm [shape: f32[1024,1024], index: 1, kind: input, shape index: {}]
  %s2 = inlined_call_operand.hbm [shape: f32[1,1024], index: 2, kind: input, shape index: {}]
  %s3 = inlined_call_operand.hbm [shape: f32[4,1024], index: 3, kind: output, shape index: {}]
  %s4 = sld [smem:[#allocation0]]
  $region34: #{tpu_custom_call.1} parent=0
    _
  %s6 = ssub.s32 1, %s4
  %s7 = scalar_select 0, %s6, %s4
  $region1: #{tpu_custom_call.1} parent=0
    #allocation2 [shape = 'u8[16384]{0}', space=vmem, size = 0x4000, scoped, tag = 'input window, operand 0, single buffered']
    #allocation3 [shape = 's32[1]{0}', space=sflag, size = 0x4, scoped, tag = 'scoped memory for tpu_custom_call.1']
    #allocation4 [shape = 's32[1]{0}', space=sflag, size = 0x4, scoped, tag = 'scoped memory for tpu_custom_call.1']
    #allocation5 [shape = 'u8[4194304]{0}', space=vmem, size = 0x400000, scoped, tag = 'input window, operand 1, single buffered']
    #allocation6 [shape = 's32[1]{0}', space=sflag, size = 0x4, scoped, tag = 'scoped memory for tpu_custom_call.1']
    #allocation7 [shape = 'u8[4096]{0}', space=vmem, size = 0x1000, scoped, tag = 'input window, operand 2, single buffered']
    #allocation8 [shape = 'u8[16384]{0}', space=vmem, size = 0x4000, scoped, tag = 'output window, operand 0, single buffered']
    %8 = vsyncpa [#allocation3], 0
    %9 = vsyncpa [#allocation6], 0
    %10 = vsyncpa [#allocation4], 0
    // Predicated region
    $region2: #{tpu_custom_call.1} parent=1 // pred_check
      _
    $region3: #{tpu_custom_call.1} parent=1 // pred_check_branch
      %12 = sbr.rel (0) target = $region5
    $region4: #{tpu_custom_call.1} parent=1 // pred_region
      %14 = vsyncadd [#allocation3], 0
      %s16 = sshll.u32 %s0, 4
      %s17 = int_to_ptr.hbm [resolvable:$true] %s16
      %s18 = sshll.u32 [#allocation2], 4
      %s19 = int_to_ptr.vmem [resolvable:$true] %s18
      %21 = dma.hbm_to_vmem [thread:$0]  %s17, 512, %s19, [#allocation3]
    $region5: #{tpu_custom_call.1} parent=1 // pred_fallthru
      _
    // Predicated region
    $region6: #{tpu_custom_call.1} parent=1 // pred_check
      _
    $region7: #{tpu_custom_call.1} parent=1 // pred_check_branch
      %23 = sbr.rel (0) target = $region9
    $region8: #{tpu_custom_call.1} parent=1 // pred_region
      %25 = vsyncadd [#allocation6], 0
      %s26 = sshll.u32 %s1, 4
      %s27 = int_to_ptr.hbm [resolvable:$true] %s26
      %s28 = sshll.u32 [#allocation5], 4
      %s29 = int_to_ptr.vmem [resolvable:$true] %s28
      %34 = dma.hbm_to_vmem [thread:$0]  %s27, 131072, %s29, [#allocation6], 1024, 1024, 64
    $region9: #{tpu_custom_call.1} parent=1 // pred_fallthru
      _
    // Predicated region
    $region10: #{tpu_custom_call.1} parent=1 // pred_check
      _
    $region11: #{tpu_custom_call.1} parent=1 // pred_check_branch
      %36 = sbr.rel (0) target = $region13
    $region12: #{tpu_custom_call.1} parent=1 // pred_region
      %38 = vsyncadd [#allocation6], 0
      %s40 = sshll.u32 %s2, 4
      %s41 = int_to_ptr.hbm [resolvable:$true] %s40
      %s42 = sshll.u32 [#allocation7], 4
      %s43 = int_to_ptr.vmem [resolvable:$true] %s42
      %45 = dma.hbm_to_vmem [thread:$0]  %s41, 128, %s43, [#allocation6]
    $region13: #{tpu_custom_call.1} parent=1 // pred_fallthru
      _
    // Predicated region
    $region14: #{tpu_custom_call.1} parent=1 // pred_check
      _
    $region15: #{tpu_custom_call.1} parent=1 // pred_check_branch
      %47 = sbr.rel (0) target = $region17
    $region16: #{tpu_custom_call.1} parent=1 // pred_region
      %49 = dma.done [#allocation3], 512
    $region17: #{tpu_custom_call.1} parent=1 // pred_fallthru
      _
    // Predicated region
    $region18: #{tpu_custom_call.1} parent=1 // pred_check
      _
    $region19: #{tpu_custom_call.1} parent=1 // pred_check_branch
      %51 = sbr.rel (0) target = $region21
    $region20: #{tpu_custom_call.1} parent=1 // pred_region
      %53 = dma.done [#allocation6], 131072
    $region21: #{tpu_custom_call.1} parent=1 // pred_fallthru
      _
    // Predicated region
    $region22: #{tpu_custom_call.1} parent=1 // pred_check
      _
    $region23: #{tpu_custom_call.1} parent=1 // pred_check_branch
      %55 = sbr.rel (0) target = $region25
    $region24: #{tpu_custom_call.1} parent=1 // pred_region
      %57 = dma.done [#allocation6], 128
    $region25: #{tpu_custom_call.1} parent=1 // pred_fallthru
      _
    %v58 = vld [vmem:[#allocation2] sm:$0xff]
    %v59 = vld [vmem:[#allocation2 + $0x8] sm:$0xff]
    %v60 = vld [vmem:[#allocation2 + $0x10] sm:$0xff]
    %v61 = vld [vmem:[#allocation2 + $0x18] sm:$0xff]
    %v62 = vld [vmem:[#allocation5] sm:$0xff]
    %v63 = vld [vmem:[#allocation5 + $0x8] sm:$0xff]
    %v64 = vld [vmem:[#allocation5 + $0x10] sm:$0xff]
    %v65 = vld [vmem:[#allocation5 + $0x18] sm:$0xff]
    %v66 = vld [vmem:[#allocation5 + $0x20] sm:$0xff]
    %v67 = vld [vmem:[#allocation5 + $0x28] sm:$0xff]
    %v68 = vld [vmem:[#allocation5 + $0x30] sm:$0xff]
    %v69 = vld [vmem:[#allocation5 + $0x38] sm:$0xff]
    %v70 = vld [vmem:[#allocation5 + $0x40] sm:$0xff]
    %v71 = vld [vmem:[#allocation5 + $0x48] sm:$0xff]
    %v72 = vld [vmem:[#allocation5 + $0x50] sm:$0xff]
    %v73 = vld [vmem:[#allocation5 + $0x58] sm:$0xff]
    %v74 = vld [vmem:[#allocation5 + $0x60] sm:$0xff]
    %v75 = vld [vmem:[#allocation5 + $0x68] sm:$0xff]
    %v76 = vld [vmem:[#allocation5 + $0x70] sm:$0xff]
    %v77 = vld [vmem:[#allocation5 + $0x78] sm:$0xff]
    %v78 = vld [vmem:[#allocation5 + $0x80] sm:$0xff]
    %v79 = vld [vmem:[#allocation5 + $0x88] sm:$0xff]
    %v80 = vld [vmem:[#allocation5 + $0x90] sm:$0xff]
    %v81 = vld [vmem:[#allocation5 + $0x98] sm:$0xff]
    %v82 = vld [vmem:[#allocation5 + $0xa0] sm:$0xff]
    %v83 = vld [vmem:[#allocation5 + $0xa8] sm:$0xff]
    %v84 = vld [vmem:[#allocation5 + $0xb0] sm:$0xff]
    %v85 = vld [vmem:[#allocation5 + $0xb8] sm:$0xff]
    %v86 = vld [vmem:[#allocation5 + $0xc0] sm:$0xff]
    %v87 = vld [vmem:[#allocation5 + $0xc8] sm:$0xff]
    %v88 = vld [vmem:[#allocation5 + $0xd0] sm:$0xff]
    %v89 = vld [vmem:[#allocation5 + $0xd8] sm:$0xff]
    %v90 = vld [vmem:[#allocation5 + $0xe0] sm:$0xff]
    %v91 = vld [vmem:[#allocation5 + $0xe8] sm:$0xff]
    %v92 = vld [vmem:[#allocation5 + $0xf0] sm:$0xff]
    %v93 = vld [vmem:[#allocation5 + $0xf8] sm:$0xff]
    %v94 = vld [vmem:[#allocation5 + $0x100] sm:$0xff]
    %v95 = vld [vmem:[#allocation5 + $0x108] sm:$0xff]
    %v96 = vld [vmem:[#allocation5 + $0x110] sm:$0xff]
    %v97 = vld [vmem:[#allocation5 + $0x118] sm:$0xff]
    %v98 = vld [vmem:[#allocation5 + $0x120] sm:$0xff]
    %v99 = vld [vmem:[#allocation5 + $0x128] sm:$0xff]
    %v100 = vld [vmem:[#allocation5 + $0x130] sm:$0xff]
    %v101 = vld [vmem:[#allocation5 + $0x138] sm:$0xff]
    %v102 = vld [vmem:[#allocation5 + $0x140] sm:$0xff]
    %v103 = vld [vmem:[#allocation5 + $0x148] sm:$0xff]
    %v104 = vld [vmem:[#allocation5 + $0x150] sm:$0xff]
    %v105 = vld [vmem:[#allocation5 + $0x158] sm:$0xff]
    %v106 = vld [vmem:[#allocation5 + $0x160] sm:$0xff]
    %v107 = vld [vmem:[#allocation5 + $0x168] sm:$0xff]
    %v108 = vld [vmem:[#allocation5 + $0x170] sm:$0xff]
    %v109 = vld [vmem:[#allocation5 + $0x178] sm:$0xff]
    %v110 = vld [vmem:[#allocation5 + $0x180] sm:$0xff]
    %v111 = vld [vmem:[#allocation5 + $0x188] sm:$0xff]
    %v112 = vld [vmem:[#allocation5 + $0x190] sm:$0xff]
    %v113 = vld [vmem:[#allocation5 + $0x198] sm:$0xff]
    %v114 = vld [vmem:[#allocation5 + $0x1a0] sm:$0xff]
    %v115 = vld [vmem:[#allocation5 + $0x1a8] sm:$0xff]
    %v116 = vld [vmem:[#allocation5 + $0x1b0] sm:$0xff]
    %v117 = vld [vmem:[#allocation5 + $0x1b8] sm:$0xff]
    %v118 = vld [vmem:[#allocation5 + $0x1c0] sm:$0xff]
    %v119 = vld [vmem:[#allocation5 + $0x1c8] sm:$0xff]
    %v120 = vld [vmem:[#allocation5 + $0x1d0] sm:$0xff]
    %v121 = vld [vmem:[#allocation5 + $0x1d8] sm:$0xff]
    %v122 = vld [vmem:[#allocation5 + $0x1e0] sm:$0xff]
    %v123 = vld [vmem:[#allocation5 + $0x1e8] sm:$0xff]
    %v124 = vld [vmem:[#allocation5 + $0x1f0] sm:$0xff]
    %v125 = vld [vmem:[#allocation5 + $0x1f8] sm:$0xff]
    %v126 = vld [vmem:[#allocation5 + $0x200] sm:$0xff]
    %v127 = vld [vmem:[#allocation5 + $0x208] sm:$0xff]
    %v128 = vld [vmem:[#allocation5 + $0x210] sm:$0xff]
    %v129 = vld [vmem:[#allocation5 + $0x218] sm:$0xff]
    %v130 = vld [vmem:[#allocation5 + $0x220] sm:$0xff]
    %v131 = vld [vmem:[#allocation5 + $0x228] sm:$0xff]
    %v132 = vld [vmem:[#allocation5 + $0x230] sm:$0xff]
    %v133 = vld [vmem:[#allocation5 + $0x238] sm:$0xff]
    %v134 = vld [vmem:[#allocation5 + $0x240] sm:$0xff]
    %v135 = vld [vmem:[#allocation5 + $0x248] sm:$0xff]
    %v136 = vld [vmem:[#allocation5 + $0x250] sm:$0xff]
    %v137 = vld [vmem:[#allocation5 + $0x258] sm:$0xff]
    %v138 = vld [vmem:[#allocation5 + $0x260] sm:$0xff]
    %v139 = vld [vmem:[#allocation5 + $0x268] sm:$0xff]
    %v140 = vld [vmem:[#allocation5 + $0x270] sm:$0xff]
    %v141 = vld [vmem:[#allocation5 + $0x278] sm:$0xff]
    %v142 = vld [vmem:[#allocation5 + $0x280] sm:$0xff]
    %v143 = vld [vmem:[#allocation5 + $0x288] sm:$0xff]
    %v144 = vld [vmem:[#allocation5 + $0x290] sm:$0xff]
    %v145 = vld [vmem:[#allocation5 + $0x298] sm:$0xff]
    %v146 = vld [vmem:[#allocation5 + $0x2a0] sm:$0xff]
    %v147 = vld [vmem:[#allocation5 + $0x2a8] sm:$0xff]
    %v148 = vld [vmem:[#allocation5 + $0x2b0] sm:$0xff]
    %v149 = vld [vmem:[#allocation5 + $0x2b8] sm:$0xff]
    %v150 = vld [vmem:[#allocation5 + $0x2c0] sm:$0xff]
    %v151 = vld [vmem:[#allocation5 + $0x2c8] sm:$0xff]
    %v152 = vld [vmem:[#allocation5 + $0x2d0] sm:$0xff]
    %v153 = vld [vmem:[#allocation5 + $0x2d8] sm:$0xff]
    %v154 = vld [vmem:[#allocation5 + $0x2e0] sm:$0xff]
    %v155 = vld [vmem:[#allocation5 + $0x2e8] sm:$0xff]
    %v156 = vld [vmem:[#allocation5 + $0x2f0] sm:$0xff]
    %v157 = vld [vmem:[#allocation5 + $0x2f8] sm:$0xff]
    %v158 = vld [vmem:[#allocation5 + $0x300] sm:$0xff]
    %v159 = vld [vmem:[#allocation5 + $0x308] sm:$0xff]
    %v160 = vld [vmem:[#allocation5 + $0x310] sm:$0xff]
    %v161 = vld [vmem:[#allocation5 + $0x318] sm:$0xff]
    %v162 = vld [vmem:[#allocation5 + $0x320] sm:$0xff]
    %v163 = vld [vmem:[#allocation5 + $0x328] sm:$0xff]
    %v164 = vld [vmem:[#allocation5 + $0x330] sm:$0xff]
    %v165 = vld [vmem:[#allocation5 + $0x338] sm:$0xff]
    %v166 = vld [vmem:[#allocation5 + $0x340] sm:$0xff]
    %v167 = vld [vmem:[#allocation5 + $0x348] sm:$0xff]
    %v168 = vld [vmem:[#allocation5 + $0x350] sm:$0xff]
    %v169 = vld [vmem:[#allocation5 + $0x358] sm:$0xff]
    %v170 = vld [vmem:[#allocation5 + $0x360] sm:$0xff]
    %v171 = vld [vmem:[#allocation5 + $0x368] sm:$0xff]
    %v172 = vld [vmem:[#allocation5 + $0x370] sm:$0xff]
    %v173 = vld [vmem:[#allocation5 + $0x378] sm:$0xff]
    %v174 = vld [vmem:[#allocation5 + $0x380] sm:$0xff]
    %v175 = vld [vmem:[#allocation5 + $0x388] sm:$0xff]
    %v176 = vld [vmem:[#allocation5 + $0x390] sm:$0xff]
    %v177 = vld [vmem:[#allocation5 + $0x398] sm:$0xff]
    %v178 = vld [vmem:[#allocation5 + $0x3a0] sm:$0xff]
    %v179 = vld [vmem:[#allocation5 + $0x3a8] sm:$0xff]
    %v180 = vld [vmem:[#allocation5 + $0x3b0] sm:$0xff]
    %v181 = vld [vmem:[#allocation5 + $0x3b8] sm:$0xff]
    %v182 = vld [vmem:[#allocation5 + $0x3c0] sm:$0xff]
    %v183 = vld [vmem:[#allocation5 + $0x3c8] sm:$0xff]
    %v184 = vld [vmem:[#allocation5 + $0x3d0] sm:$0xff]
    %v185 = vld [vmem:[#allocation5 + $0x3d8] sm:$0xff]
    %v186 = vld [vmem:[#allocation5 + $0x3e0] sm:$0xff]
    %v187 = vld [vmem:[#allocation5 + $0x3e8] sm:$0xff]
    %v188 = vld [vmem:[#allocation5 + $0x3f0] sm:$0xff]
    %v189 = vld [vmem:[#allocation5 + $0x3f8] sm:$0xff]
    %v190 = vld [vmem:[#allocation5 + $0x400] sm:$0xff]
    %v191 = vld [vmem:[#allocation5 + $0x408] sm:$0xff]
    %v192 = vld [vmem:[#allocation5 + $0x410] sm:$0xff]
    %v193 = vld [vmem:[#allocation5 + $0x418] sm:$0xff]
    %v194 = vld [vmem:[#allocation5 + $0x420] sm:$0xff]
    %v195 = vld [vmem:[#allocation5 + $0x428] sm:$0xff]
    %v196 = vld [vmem:[#allocation5 + $0x430] sm:$0xff]
    %v197 = vld [vmem:[#allocation5 + $0x438] sm:$0xff]
    %v198 = vld [vmem:[#allocation5 + $0x440] sm:$0xff]
    %v199 = vld [vmem:[#allocation5 + $0x448] sm:$0xff]
    %v200 = vld [vmem:[#allocation5 + $0x450] sm:$0xff]
    %v201 = vld [vmem:[#allocation5 + $0x458] sm:$0xff]
    %v202 = vld [vmem:[#allocation5 + $0x460] sm:$0xff]
    %v203 = vld [vmem:[#allocation5 + $0x468] sm:$0xff]
    %v204 = vld [vmem:[#allocation5 + $0x470] sm:$0xff]
    %v205 = vld [vmem:[#allocation5 + $0x478] sm:$0xff]
    %v206 = vld [vmem:[#allocation5 + $0x480] sm:$0xff]
    %v207 = vld [vmem:[#allocation5 + $0x488] sm:$0xff]
    %v208 = vld [vmem:[#allocation5 + $0x490] sm:$0xff]
    %v209 = vld [vmem:[#allocation5 + $0x498] sm:$0xff]
    %v210 = vld [vmem:[#allocation5 + $0x4a0] sm:$0xff]
    %v211 = vld [vmem:[#allocation5 + $0x4a8] sm:$0xff]
    %v212 = vld [vmem:[#allocation5 + $0x4b0] sm:$0xff]
    %v213 = vld [vmem:[#allocation5 + $0x4b8] sm:$0xff]
    %v214 = vld [vmem:[#allocation5 + $0x4c0] sm:$0xff]
    %v215 = vld [vmem:[#allocation5 + $0x4c8] sm:$0xff]
    %v216 = vld [vmem:[#allocation5 + $0x4d0] sm:$0xff]
    %v217 = vld [vmem:[#allocation5 + $0x4d8] sm:$0xff]
    %v218 = vld [vmem:[#allocation5 + $0x4e0] sm:$0xff]
    %v219 = vld [vmem:[#allocation5 + $0x4e8] sm:$0xff]
    %v220 = vld [vmem:[#allocation5 + $0x4f0] sm:$0xff]
    %v221 = vld [vmem:[#allocation5 + $0x4f8] sm:$0xff]
    %v222 = vld [vmem:[#allocation5 + $0x500] sm:$0xff]
    %v223 = vld [vmem:[#allocation5 + $0x508] sm:$0xff]
    %v224 = vld [vmem:[#allocation5 + $0x510] sm:$0xff]
    %v225 = vld [vmem:[#allocation5 + $0x518] sm:$0xff]
    %v226 = vld [vmem:[#allocation5 + $0x520] sm:$0xff]
    %v227 = vld [vmem:[#allocation5 + $0x528] sm:$0xff]
    %v228 = vld [vmem:[#allocation5 + $0x530] sm:$0xff]
    %v229 = vld [vmem:[#allocation5 + $0x538] sm:$0xff]
    %v230 = vld [vmem:[#allocation5 + $0x540] sm:$0xff]
    %v231 = vld [vmem:[#allocation5 + $0x548] sm:$0xff]
    %v232 = vld [vmem:[#allocation5 + $0x550] sm:$0xff]
    %v233 = vld [vmem:[#allocation5 + $0x558] sm:$0xff]
    %v234 = vld [vmem:[#allocation5 + $0x560] sm:$0xff]
    %v235 = vld [vmem:[#allocation5 + $0x568] sm:$0xff]
    %v236 = vld [vmem:[#allocation5 + $0x570] sm:$0xff]
    %v237 = vld [vmem:[#allocation5 + $0x578] sm:$0xff]
    %v238 = vld [vmem:[#allocation5 + $0x580] sm:$0xff]
    %v239 = vld [vmem:[#allocation5 + $0x588] sm:$0xff]
    %v240 = vld [vmem:[#allocation5 + $0x590] sm:$0xff]
    %v241 = vld [vmem:[#allocation5 + $0x598] sm:$0xff]
    %v242 = vld [vmem:[#allocation5 + $0x5a0] sm:$0xff]
    %v243 = vld [vmem:[#allocation5 + $0x5a8] sm:$0xff]
    %v244 = vld [vmem:[#allocation5 + $0x5b0] sm:$0xff]
    %v245 = vld [vmem:[#allocation5 + $0x5b8] sm:$0xff]
    %v246 = vld [vmem:[#allocation5 + $0x5c0] sm:$0xff]
    %v247 = vld [vmem:[#allocation5 + $0x5c8] sm:$0xff]
    %v248 = vld [vmem:[#allocation5 + $0x5d0] sm:$0xff]
    %v249 = vld [vmem:[#allocation5 + $0x5d8] sm:$0xff]
    %v250 = vld [vmem:[#allocation5 + $0x5e0] sm:$0xff]
    %v251 = vld [vmem:[#allocation5 + $0x5e8] sm:$0xff]
    %v252 = vld [vmem:[#allocation5 + $0x5f0] sm:$0xff]
    %v253 = vld [vmem:[#allocation5 + $0x5f8] sm:$0xff]
    %v254 = vld [vmem:[#allocation5 + $0x600] sm:$0xff]
    %v255 = vld [vmem:[#allocation5 + $0x608] sm:$0xff]
    %v256 = vld [vmem:[#allocation5 + $0x610] sm:$0xff]
    %v257 = vld [vmem:[#allocation5 + $0x618] sm:$0xff]
    %v258 = vld [vmem:[#allocation5 + $0x620] sm:$0xff]
    %v259 = vld [vmem:[#allocation5 + $0x628] sm:$0xff]
    %v260 = vld [vmem:[#allocation5 + $0x630] sm:$0xff]
    %v261 = vld [vmem:[#allocation5 + $0x638] sm:$0xff]
    %v262 = vld [vmem:[#allocation5 + $0x640] sm:$0xff]
    %v263 = vld [vmem:[#allocation5 + $0x648] sm:$0xff]
    %v264 = vld [vmem:[#allocation5 + $0x650] sm:$0xff]
    %v265 = vld [vmem:[#allocation5 + $0x658] sm:$0xff]
    %v266 = vld [vmem:[#allocation5 + $0x660] sm:$0xff]
    %v267 = vld [vmem:[#allocation5 + $0x668] sm:$0xff]
    %v268 = vld [vmem:[#allocation5 + $0x670] sm:$0xff]
    %v269 = vld [vmem:[#allocation5 + $0x678] sm:$0xff]
    %v270 = vld [vmem:[#allocation5 + $0x680] sm:$0xff]
    %v271 = vld [vmem:[#allocation5 + $0x688] sm:$0xff]
    %v272 = vld [vmem:[#allocation5 + $0x690] sm:$0xff]
    %v273 = vld [vmem:[#allocation5 + $0x698] sm:$0xff]
    %v274 = vld [vmem:[#allocation5 + $0x6a0] sm:$0xff]
    %v275 = vld [vmem:[#allocation5 + $0x6a8] sm:$0xff]
    %v276 = vld [vmem:[#allocation5 + $0x6b0] sm:$0xff]
    %v277 = vld [vmem:[#allocation5 + $0x6b8] sm:$0xff]
    %v278 = vld [vmem:[#allocation5 + $0x6c0] sm:$0xff]
    %v279 = vld [vmem:[#allocation5 + $0x6c8] sm:$0xff]
    %v280 = vld [vmem:[#allocation5 + $0x6d0] sm:$0xff]
    %v281 = vld [vmem:[#allocation5 + $0x6d8] sm:$0xff]
    %v282 = vld [vmem:[#allocation5 + $0x6e0] sm:$0xff]
    %v283 = vld [vmem:[#allocation5 + $0x6e8] sm:$0xff]
    %v284 = vld [vmem:[#allocation5 + $0x6f0] sm:$0xff]
    %v285 = vld [vmem:[#allocation5 + $0x6f8] sm:$0xff]
    %v286 = vld [vmem:[#allocation5 + $0x700] sm:$0xff]
    %v287 = vld [vmem:[#allocation5 + $0x708] sm:$0xff]
    %v288 = vld [vmem:[#allocation5 + $0x710] sm:$0xff]
    %v289 = vld [vmem:[#allocation5 + $0x718] sm:$0xff]
    %v290 = vld [vmem:[#allocation5 + $0x720] sm:$0xff]
    %v291 = vld [vmem:[#allocation5 + $0x728] sm:$0xff]
    %v292 = vld [vmem:[#allocation5 + $0x730] sm:$0xff]
    %v293 = vld [vmem:[#allocation5 + $0x738] sm:$0xff]
    %v294 = vld [vmem:[#allocation5 + $0x740] sm:$0xff]
    %v295 = vld [vmem:[#allocation5 + $0x748] sm:$0xff]
    %v296 = vld [vmem:[#allocation5 + $0x750] sm:$0xff]
    %v297 = vld [vmem:[#allocation5 + $0x758] sm:$0xff]
    %v298 = vld [vmem:[#allocation5 + $0x760] sm:$0xff]
    %v299 = vld [vmem:[#allocation5 + $0x768] sm:$0xff]
    %v300 = vld [vmem:[#allocation5 + $0x770] sm:$0xff]
    %v301 = vld [vmem:[#allocation5 + $0x778] sm:$0xff]
    %v302 = vld [vmem:[#allocation5 + $0x780] sm:$0xff]
    %v303 = vld [vmem:[#allocation5 + $0x788] sm:$0xff]
    %v304 = vld [vmem:[#allocation5 + $0x790] sm:$0xff]
    %v305 = vld [vmem:[#allocation5 + $0x798] sm:$0xff]
    %v306 = vld [vmem:[#allocation5 + $0x7a0] sm:$0xff]
    %v307 = vld [vmem:[#allocation5 + $0x7a8] sm:$0xff]
    %v308 = vld [vmem:[#allocation5 + $0x7b0] sm:$0xff]
    %v309 = vld [vmem:[#allocation5 + $0x7b8] sm:$0xff]
    %v310 = vld [vmem:[#allocation5 + $0x7c0] sm:$0xff]
    %v311 = vld [vmem:[#allocation5 + $0x7c8] sm:$0xff]
    %v312 = vld [vmem:[#allocation5 + $0x7d0] sm:$0xff]
    %v313 = vld [vmem:[#allocation5 + $0x7d8] sm:$0xff]
    %v314 = vld [vmem:[#allocation5 + $0x7e0] sm:$0xff]
    %v315 = vld [vmem:[#allocation5 + $0x7e8] sm:$0xff]
    %v316 = vld [vmem:[#allocation5 + $0x7f0] sm:$0xff]
    %v317 = vld [vmem:[#allocation5 + $0x7f8] sm:$0xff]
    %v318 = vld [vmem:[#allocation5 + $0x800] sm:$0xff]
    %v319 = vld [vmem:[#allocation5 + $0x808] sm:$0xff]
    %v320 = vld [vmem:[#allocation5 + $0x810] sm:$0xff]
    %v321 = vld [vmem:[#allocation5 + $0x818] sm:$0xff]
    %v322 = vld [vmem:[#allocation5 + $0x820] sm:$0xff]
    %v323 = vld [vmem:[#allocation5 + $0x828] sm:$0xff]
    %v324 = vld [vmem:[#allocation5 + $0x830] sm:$0xff]
    %v325 = vld [vmem:[#allocation5 + $0x838] sm:$0xff]
    %v326 = vld [vmem:[#allocation5 + $0x840] sm:$0xff]
    %v327 = vld [vmem:[#allocation5 + $0x848] sm:$0xff]
    %v328 = vld [vmem:[#allocation5 + $0x850] sm:$0xff]
    %v329 = vld [vmem:[#allocation5 + $0x858] sm:$0xff]
    %v330 = vld [vmem:[#allocation5 + $0x860] sm:$0xff]
    %v331 = vld [vmem:[#allocation5 + $0x868] sm:$0xff]
    %v332 = vld [vmem:[#allocation5 + $0x870] sm:$0xff]
    %v333 = vld [vmem:[#allocation5 + $0x878] sm:$0xff]
    %v334 = vld [vmem:[#allocation5 + $0x880] sm:$0xff]
    %v335 = vld [vmem:[#allocation5 + $0x888] sm:$0xff]
    %v336 = vld [vmem:[#allocation5 + $0x890] sm:$0xff]
    %v337 = vld [vmem:[#allocation5 + $0x898] sm:$0xff]
    %v338 = vld [vmem:[#allocation5 + $0x8a0] sm:$0xff]
    %v339 = vld [vmem:[#allocation5 + $0x8a8] sm:$0xff]
    %v340 = vld [vmem:[#allocation5 + $0x8b0] sm:$0xff]
    %v341 = vld [vmem:[#allocation5 + $0x8b8] sm:$0xff]
    %v342 = vld [vmem:[#allocation5 + $0x8c0] sm:$0xff]
    %v343 = vld [vmem:[#allocation5 + $0x8c8] sm:$0xff]
    %v344 = vld [vmem:[#allocation5 + $0x8d0] sm:$0xff]
    %v345 = vld [vmem:[#allocation5 + $0x8d8] sm:$0xff]
    %v346 = vld [vmem:[#allocation5 + $0x8e0] sm:$0xff]
    %v347 = vld [vmem:[#allocation5 + $0x8e8] sm:$0xff]
    %v348 = vld [vmem:[#allocation5 + $0x8f0] sm:$0xff]
    %v349 = vld [vmem:[#allocation5 + $0x8f8] sm:$0xff]
    %v350 = vld [vmem:[#allocation5 + $0x900] sm:$0xff]
    %v351 = vld [vmem:[#allocation5 + $0x908] sm:$0xff]
    %v352 = vld [vmem:[#allocation5 + $0x910] sm:$0xff]
    %v353 = vld [vmem:[#allocation5 + $0x918] sm:$0xff]
    %v354 = vld [vmem:[#allocation5 + $0x920] sm:$0xff]
    %v355 = vld [vmem:[#allocation5 + $0x928] sm:$0xff]
    %v356 = vld [vmem:[#allocation5 + $0x930] sm:$0xff]
    %v357 = vld [vmem:[#allocation5 + $0x938] sm:$0xff]
    %v358 = vld [vmem:[#allocation5 + $0x940] sm:$0xff]
    %v359 = vld [vmem:[#allocation5 + $0x948] sm:$0xff]
    %v360 = vld [vmem:[#allocation5 + $0x950] sm:$0xff]
    %v361 = vld [vmem:[#allocation5 + $0x958] sm:$0xff]
    %v362 = vld [vmem:[#allocation5 + $0x960] sm:$0xff]
    %v363 = vld [vmem:[#allocation5 + $0x968] sm:$0xff]
    %v364 = vld [vmem:[#allocation5 + $0x970] sm:$0xff]
    %v365 = vld [vmem:[#allocation5 + $0x978] sm:$0xff]
    %v366 = vld [vmem:[#allocation5 + $0x980] sm:$0xff]
    %v367 = vld [vmem:[#allocation5 + $0x988] sm:$0xff]
    %v368 = vld [vmem:[#allocation5 + $0x990] sm:$0xff]
    %v369 = vld [vmem:[#allocation5 + $0x998] sm:$0xff]
    %v370 = vld [vmem:[#allocation5 + $0x9a0] sm:$0xff]
    %v371 = vld [vmem:[#allocation5 + $0x9a8] sm:$0xff]
    %v372 = vld [vmem:[#allocation5 + $0x9b0] sm:$0xff]
    %v373 = vld [vmem:[#allocation5 + $0x9b8] sm:$0xff]
    %v374 = vld [vmem:[#allocation5 + $0x9c0] sm:$0xff]
    %v375 = vld [vmem:[#allocation5 + $0x9c8] sm:$0xff]
    %v376 = vld [vmem:[#allocation5 + $0x9d0] sm:$0xff]
    %v377 = vld [vmem:[#allocation5 + $0x9d8] sm:$0xff]
    %v378 = vld [vmem:[#allocation5 + $0x9e0] sm:$0xff]
    %v379 = vld [vmem:[#allocation5 + $0x9e8] sm:$0xff]
    %v380 = vld [vmem:[#allocation5 + $0x9f0] sm:$0xff]
    %v381 = vld [vmem:[#allocation5 + $0x9f8] sm:$0xff]
    %v382 = vld [vmem:[#allocation5 + $0xa00] sm:$0xff]
    %v383 = vld [vmem:[#allocation5 + $0xa08] sm:$0xff]
    %v384 = vld [vmem:[#allocation5 + $0xa10] sm:$0xff]
    %v385 = vld [vmem:[#allocation5 + $0xa18] sm:$0xff]
    %v386 = vld [vmem:[#allocation5 + $0xa20] sm:$0xff]
    %v387 = vld [vmem:[#allocation5 + $0xa28] sm:$0xff]
    %v388 = vld [vmem:[#allocation5 + $0xa30] sm:$0xff]
    %v389 = vld [vmem:[#allocation5 + $0xa38] sm:$0xff]
    %v390 = vld [vmem:[#allocation5 + $0xa40] sm:$0xff]
    %v391 = vld [vmem:[#allocation5 + $0xa48] sm:$0xff]
    %v392 = vld [vmem:[#allocation5 + $0xa50] sm:$0xff]
    %v393 = vld [vmem:[#allocation5 + $0xa58] sm:$0xff]
    %v394 = vld [vmem:[#allocation5 + $0xa60] sm:$0xff]
    %v395 = vld [vmem:[#allocation5 + $0xa68] sm:$0xff]
    %v396 = vld [vmem:[#allocation5 + $0xa70] sm:$0xff]
    %v397 = vld [vmem:[#allocation5 + $0xa78] sm:$0xff]
    %v398 = vld [vmem:[#allocation5 + $0xa80] sm:$0xff]
    %v399 = vld [vmem:[#allocation5 + $0xa88] sm:$0xff]
    %v400 = vld [vmem:[#allocation5 + $0xa90] sm:$0xff]
    %v401 = vld [vmem:[#allocation5 + $0xa98] sm:$0xff]
    %v402 = vld [vmem:[#allocation5 + $0xaa0] sm:$0xff]
    %v403 = vld [vmem:[#allocation5 + $0xaa8] sm:$0xff]
    %v404 = vld [vmem:[#allocation5 + $0xab0] sm:$0xff]
    %v405 = vld [vmem:[#allocation5 + $0xab8] sm:$0xff]
    %v406 = vld [vmem:[#allocation5 + $0xac0] sm:$0xff]
    %v407 = vld [vmem:[#allocation5 + $0xac8] sm:$0xff]
    %v408 = vld [vmem:[#allocation5 + $0xad0] sm:$0xff]
    %v409 = vld [vmem:[#allocation5 + $0xad8] sm:$0xff]
    %v410 = vld [vmem:[#allocation5 + $0xae0] sm:$0xff]
    %v411 = vld [vmem:[#allocation5 + $0xae8] sm:$0xff]
    %v412 = vld [vmem:[#allocation5 + $0xaf0] sm:$0xff]
    %v413 = vld [vmem:[#allocation5 + $0xaf8] sm:$0xff]
    %v414 = vld [vmem:[#allocation5 + $0xb00] sm:$0xff]
    %v415 = vld [vmem:[#allocation5 + $0xb08] sm:$0xff]
    %v416 = vld [vmem:[#allocation5 + $0xb10] sm:$0xff]
    %v417 = vld [vmem:[#allocation5 + $0xb18] sm:$0xff]
    %v418 = vld [vmem:[#allocation5 + $0xb20] sm:$0xff]
    %v419 = vld [vmem:[#allocation5 + $0xb28] sm:$0xff]
    %v420 = vld [vmem:[#allocation5 + $0xb30] sm:$0xff]
    %v421 = vld [vmem:[#allocation5 + $0xb38] sm:$0xff]
    %v422 = vld [vmem:[#allocation5 + $0xb40] sm:$0xff]
    %v423 = vld [vmem:[#allocation5 + $0xb48] sm:$0xff]
    %v424 = vld [vmem:[#allocation5 + $0xb50] sm:$0xff]
    %v425 = vld [vmem:[#allocation5 + $0xb58] sm:$0xff]
    %v426 = vld [vmem:[#allocation5 + $0xb60] sm:$0xff]
    %v427 = vld [vmem:[#allocation5 + $0xb68] sm:$0xff]
    %v428 = vld [vmem:[#allocation5 + $0xb70] sm:$0xff]
    %v429 = vld [vmem:[#allocation5 + $0xb78] sm:$0xff]
    %v430 = vld [vmem:[#allocation5 + $0xb80] sm:$0xff]
    %v431 = vld [vmem:[#allocation5 + $0xb88] sm:$0xff]
    %v432 = vld [vmem:[#allocation5 + $0xb90] sm:$0xff]
    %v433 = vld [vmem:[#allocation5 + $0xb98] sm:$0xff]
    %v434 = vld [vmem:[#allocation5 + $0xba0] sm:$0xff]
    %v435 = vld [vmem:[#allocation5 + $0xba8] sm:$0xff]
    %v436 = vld [vmem:[#allocation5 + $0xbb0] sm:$0xff]
    %v437 = vld [vmem:[#allocation5 + $0xbb8] sm:$0xff]
    %v438 = vld [vmem:[#allocation5 + $0xbc0] sm:$0xff]
    %v439 = vld [vmem:[#allocation5 + $0xbc8] sm:$0xff]
    %v440 = vld [vmem:[#allocation5 + $0xbd0] sm:$0xff]
    %v441 = vld [vmem:[#allocation5 + $0xbd8] sm:$0xff]
    %v442 = vld [vmem:[#allocation5 + $0xbe0] sm:$0xff]
    %v443 = vld [vmem:[#allocation5 + $0xbe8] sm:$0xff]
    %v444 = vld [vmem:[#allocation5 + $0xbf0] sm:$0xff]
    %v445 = vld [vmem:[#allocation5 + $0xbf8] sm:$0xff]
    %v446 = vld [vmem:[#allocation5 + $0xc00] sm:$0xff]
    %v447 = vld [vmem:[#allocation5 + $0xc08] sm:$0xff]
    %v448 = vld [vmem:[#allocation5 + $0xc10] sm:$0xff]
    %v449 = vld [vmem:[#allocation5 + $0xc18] sm:$0xff]
    %v450 = vld [vmem:[#allocation5 + $0xc20] sm:$0xff]
    %v451 = vld [vmem:[#allocation5 + $0xc28] sm:$0xff]
    %v452 = vld [vmem:[#allocation5 + $0xc30] sm:$0xff]
    %v453 = vld [vmem:[#allocation5 + $0xc38] sm:$0xff]
    %v454 = vld [vmem:[#allocation5 + $0xc40] sm:$0xff]
    %v455 = vld [vmem:[#allocation5 + $0xc48] sm:$0xff]
    %v456 = vld [vmem:[#allocation5 + $0xc50] sm:$0xff]
    %v457 = vld [vmem:[#allocation5 + $0xc58] sm:$0xff]
    %v458 = vld [vmem:[#allocation5 + $0xc60] sm:$0xff]
    %v459 = vld [vmem:[#allocation5 + $0xc68] sm:$0xff]
    %v460 = vld [vmem:[#allocation5 + $0xc70] sm:$0xff]
    %v461 = vld [vmem:[#allocation5 + $0xc78] sm:$0xff]
    %v462 = vld [vmem:[#allocation5 + $0xc80] sm:$0xff]
    %v463 = vld [vmem:[#allocation5 + $0xc88] sm:$0xff]
    %v464 = vld [vmem:[#allocation5 + $0xc90] sm:$0xff]
    %v465 = vld [vmem:[#allocation5 + $0xc98] sm:$0xff]
    %v466 = vld [vmem:[#allocation5 + $0xca0] sm:$0xff]
    %v467 = vld [vmem:[#allocation5 + $0xca8] sm:$0xff]
    %v468 = vld [vmem:[#allocation5 + $0xcb0] sm:$0xff]
    %v469 = vld [vmem:[#allocation5 + $0xcb8] sm:$0xff]
    %v470 = vld [vmem:[#allocation5 + $0xcc0] sm:$0xff]
    %v471 = vld [vmem:[#allocation5 + $0xcc8] sm:$0xff]
    %v472 = vld [vmem:[#allocation5 + $0xcd0] sm:$0xff]
    %v473 = vld [vmem:[#allocation5 + $0xcd8] sm:$0xff]
    %v474 = vld [vmem:[#allocation5 + $0xce0] sm:$0xff]
    %v475 = vld [vmem:[#allocation5 + $0xce8] sm:$0xff]
    %v476 = vld [vmem:[#allocation5 + $0xcf0] sm:$0xff]
    %v477 = vld [vmem:[#allocation5 + $0xcf8] sm:$0xff]
    %v478 = vld [vmem:[#allocation5 + $0xd00] sm:$0xff]
    %v479 = vld [vmem:[#allocation5 + $0xd08] sm:$0xff]
    %v480 = vld [vmem:[#allocation5 + $0xd10] sm:$0xff]
    %v481 = vld [vmem:[#allocation5 + $0xd18] sm:$0xff]
    %v482 = vld [vmem:[#allocation5 + $0xd20] sm:$0xff]
    %v483 = vld [vmem:[#allocation5 + $0xd28] sm:$0xff]
    %v484 = vld [vmem:[#allocation5 + $0xd30] sm:$0xff]
    %v485 = vld [vmem:[#allocation5 + $0xd38] sm:$0xff]
    %v486 = vld [vmem:[#allocation5 + $0xd40] sm:$0xff]
    %v487 = vld [vmem:[#allocation5 + $0xd48] sm:$0xff]
    %v488 = vld [vmem:[#allocation5 + $0xd50] sm:$0xff]
    %v489 = vld [vmem:[#allocation5 + $0xd58] sm:$0xff]
    %v490 = vld [vmem:[#allocation5 + $0xd60] sm:$0xff]
    %v491 = vld [vmem:[#allocation5 + $0xd68] sm:$0xff]
    %v492 = vld [vmem:[#allocation5 + $0xd70] sm:$0xff]
    %v493 = vld [vmem:[#allocation5 + $0xd78] sm:$0xff]
    %v494 = vld [vmem:[#allocation5 + $0xd80] sm:$0xff]
    %v495 = vld [vmem:[#allocation5 + $0xd88] sm:$0xff]
    %v496 = vld [vmem:[#allocation5 + $0xd90] sm:$0xff]
    %v497 = vld [vmem:[#allocation5 + $0xd98] sm:$0xff]
    %v498 = vld [vmem:[#allocation5 + $0xda0] sm:$0xff]
    %v499 = vld [vmem:[#allocation5 + $0xda8] sm:$0xff]
    %v500 = vld [vmem:[#allocation5 + $0xdb0] sm:$0xff]
    %v501 = vld [vmem:[#allocation5 + $0xdb8] sm:$0xff]
    %v502 = vld [vmem:[#allocation5 + $0xdc0] sm:$0xff]
    %v503 = vld [vmem:[#allocation5 + $0xdc8] sm:$0xff]
    %v504 = vld [vmem:[#allocation5 + $0xdd0] sm:$0xff]
    %v505 = vld [vmem:[#allocation5 + $0xdd8] sm:$0xff]
    %v506 = vld [vmem:[#allocation5 + $0xde0] sm:$0xff]
    %v507 = vld [vmem:[#allocation5 + $0xde8] sm:$0xff]
    %v508 = vld [vmem:[#allocation5 + $0xdf0] sm:$0xff]
    %v509 = vld [vmem:[#allocation5 + $0xdf8] sm:$0xff]
    %v510 = vld [vmem:[#allocation5 + $0xe00] sm:$0xff]
    %v511 = vld [vmem:[#allocation5 + $0xe08] sm:$0xff]
    %v512 = vld [vmem:[#allocation5 + $0xe10] sm:$0xff]
    %v513 = vld [vmem:[#allocation5 + $0xe18] sm:$0xff]
    %v514 = vld [vmem:[#allocation5 + $0xe20] sm:$0xff]
    %v515 = vld [vmem:[#allocation5 + $0xe28] sm:$0xff]
    %v516 = vld [vmem:[#allocation5 + $0xe30] sm:$0xff]
    %v517 = vld [vmem:[#allocation5 + $0xe38] sm:$0xff]
    %v518 = vld [vmem:[#allocation5 + $0xe40] sm:$0xff]
    %v519 = vld [vmem:[#allocation5 + $0xe48] sm:$0xff]
    %v520 = vld [vmem:[#allocation5 + $0xe50] sm:$0xff]
    %v521 = vld [vmem:[#allocation5 + $0xe58] sm:$0xff]
    %v522 = vld [vmem:[#allocation5 + $0xe60] sm:$0xff]
    %v523 = vld [vmem:[#allocation5 + $0xe68] sm:$0xff]
    %v524 = vld [vmem:[#allocation5 + $0xe70] sm:$0xff]
    %v525 = vld [vmem:[#allocation5 + $0xe78] sm:$0xff]
    %v526 = vld [vmem:[#allocation5 + $0xe80] sm:$0xff]
    %v527 = vld [vmem:[#allocation5 + $0xe88] sm:$0xff]
    %v528 = vld [vmem:[#allocation5 + $0xe90] sm:$0xff]
    %v529 = vld [vmem:[#allocation5 + $0xe98] sm:$0xff]
    %v530 = vld [vmem:[#allocation5 + $0xea0] sm:$0xff]
    %v531 = vld [vmem:[#allocation5 + $0xea8] sm:$0xff]
    %v532 = vld [vmem:[#allocation5 + $0xeb0] sm:$0xff]
    %v533 = vld [vmem:[#allocation5 + $0xeb8] sm:$0xff]
    %v534 = vld [vmem:[#allocation5 + $0xec0] sm:$0xff]
    %v535 = vld [vmem:[#allocation5 + $0xec8] sm:$0xff]
    %v536 = vld [vmem:[#allocation5 + $0xed0] sm:$0xff]
    %v537 = vld [vmem:[#allocation5 + $0xed8] sm:$0xff]
    %v538 = vld [vmem:[#allocation5 + $0xee0] sm:$0xff]
    %v539 = vld [vmem:[#allocation5 + $0xee8] sm:$0xff]
    %v540 = vld [vmem:[#allocation5 + $0xef0] sm:$0xff]
    %v541 = vld [vmem:[#allocation5 + $0xef8] sm:$0xff]
    %v542 = vld [vmem:[#allocation5 + $0xf00] sm:$0xff]
    %v543 = vld [vmem:[#allocation5 + $0xf08] sm:$0xff]
    %v544 = vld [vmem:[#allocation5 + $0xf10] sm:$0xff]
    %v545 = vld [vmem:[#allocation5 + $0xf18] sm:$0xff]
    %v546 = vld [vmem:[#allocation5 + $0xf20] sm:$0xff]
    %v547 = vld [vmem:[#allocation5 + $0xf28] sm:$0xff]
    %v548 = vld [vmem:[#allocation5 + $0xf30] sm:$0xff]
    %v549 = vld [vmem:[#allocation5 + $0xf38] sm:$0xff]
    %v550 = vld [vmem:[#allocation5 + $0xf40] sm:$0xff]
    %v551 = vld [vmem:[#allocation5 + $0xf48] sm:$0xff]
    %v552 = vld [vmem:[#allocation5 + $0xf50] sm:$0xff]
    %v553 = vld [vmem:[#allocation5 + $0xf58] sm:$0xff]
    %v554 = vld [vmem:[#allocation5 + $0xf60] sm:$0xff]
    %v555 = vld [vmem:[#allocation5 + $0xf68] sm:$0xff]
    %v556 = vld [vmem:[#allocation5 + $0xf70] sm:$0xff]
    %v557 = vld [vmem:[#allocation5 + $0xf78] sm:$0xff]
    %v558 = vld [vmem:[#allocation5 + $0xf80] sm:$0xff]
    %v559 = vld [vmem:[#allocation5 + $0xf88] sm:$0xff]
    %v560 = vld [vmem:[#allocation5 + $0xf90] sm:$0xff]
    %v561 = vld [vmem:[#allocation5 + $0xf98] sm:$0xff]
    %v562 = vld [vmem:[#allocation5 + $0xfa0] sm:$0xff]
    %v563 = vld [vmem:[#allocation5 + $0xfa8] sm:$0xff]
    %v564 = vld [vmem:[#allocation5 + $0xfb0] sm:$0xff]
    %v565 = vld [vmem:[#allocation5 + $0xfb8] sm:$0xff]
    %v566 = vld [vmem:[#allocation5 + $0xfc0] sm:$0xff]
    %v567 = vld [vmem:[#allocation5 + $0xfc8] sm:$0xff]
    %v568 = vld [vmem:[#allocation5 + $0xfd0] sm:$0xff]
    %v569 = vld [vmem:[#allocation5 + $0xfd8] sm:$0xff]
    %v570 = vld [vmem:[#allocation5 + $0xfe0] sm:$0xff]
    %v571 = vld [vmem:[#allocation5 + $0xfe8] sm:$0xff]
    %v572 = vld [vmem:[#allocation5 + $0xff0] sm:$0xff]
    %v573 = vld [vmem:[#allocation5 + $0xff8] sm:$0xff]
    %v574 = vld [vmem:[#allocation5 + $0x1000] sm:$0xff]
    %v575 = vld [vmem:[#allocation5 + $0x1008] sm:$0xff]
    %v576 = vld [vmem:[#allocation5 + $0x1010] sm:$0xff]
    %v577 = vld [vmem:[#allocation5 + $0x1018] sm:$0xff]
    %v578 = vld [vmem:[#allocation5 + $0x1020] sm:$0xff]
    %v579 = vld [vmem:[#allocation5 + $0x1028] sm:$0xff]
    %v580 = vld [vmem:[#allocation5 + $0x1030] sm:$0xff]
    %v581 = vld [vmem:[#allocation5 + $0x1038] sm:$0xff]
    %v582 = vld [vmem:[#allocation5 + $0x1040] sm:$0xff]
    %v583 = vld [vmem:[#allocation5 + $0x1048] sm:$0xff]
    %v584 = vld [vmem:[#allocation5 + $0x1050] sm:$0xff]
    %v585 = vld [vmem:[#allocation5 + $0x1058] sm:$0xff]
    %v586 = vld [vmem:[#allocation5 + $0x1060] sm:$0xff]
    %v587 = vld [vmem:[#allocation5 + $0x1068] sm:$0xff]
    %v588 = vld [vmem:[#allocation5 + $0x1070] sm:$0xff]
    %v589 = vld [vmem:[#allocation5 + $0x1078] sm:$0xff]
    %v590 = vld [vmem:[#allocation5 + $0x1080] sm:$0xff]
    %v591 = vld [vmem:[#allocation5 + $0x1088] sm:$0xff]
    %v592 = vld [vmem:[#allocation5 + $0x1090] sm:$0xff]
    %v593 = vld [vmem:[#allocation5 + $0x1098] sm:$0xff]
    %v594 = vld [vmem:[#allocation5 + $0x10a0] sm:$0xff]
    %v595 = vld [vmem:[#allocation5 + $0x10a8] sm:$0xff]
    %v596 = vld [vmem:[#allocation5 + $0x10b0] sm:$0xff]
    %v597 = vld [vmem:[#allocation5 + $0x10b8] sm:$0xff]
    %v598 = vld [vmem:[#allocation5 + $0x10c0] sm:$0xff]
    %v599 = vld [vmem:[#allocation5 + $0x10c8] sm:$0xff]
    %v600 = vld [vmem:[#allocation5 + $0x10d0] sm:$0xff]
    %v601 = vld [vmem:[#allocation5 + $0x10d8] sm:$0xff]
    %v602 = vld [vmem:[#allocation5 + $0x10e0] sm:$0xff]
    %v603 = vld [vmem:[#allocation5 + $0x10e8] sm:$0xff]
    %v604 = vld [vmem:[#allocation5 + $0x10f0] sm:$0xff]
    %v605 = vld [vmem:[#allocation5 + $0x10f8] sm:$0xff]
    %v606 = vld [vmem:[#allocation5 + $0x1100] sm:$0xff]
    %v607 = vld [vmem:[#allocation5 + $0x1108] sm:$0xff]
    %v608 = vld [vmem:[#allocation5 + $0x1110] sm:$0xff]
    %v609 = vld [vmem:[#allocation5 + $0x1118] sm:$0xff]
    %v610 = vld [vmem:[#allocation5 + $0x1120] sm:$0xff]
    %v611 = vld [vmem:[#allocation5 + $0x1128] sm:$0xff]
    %v612 = vld [vmem:[#allocation5 + $0x1130] sm:$0xff]
    %v613 = vld [vmem:[#allocation5 + $0x1138] sm:$0xff]
    %v614 = vld [vmem:[#allocation5 + $0x1140] sm:$0xff]
    %v615 = vld [vmem:[#allocation5 + $0x1148] sm:$0xff]
    %v616 = vld [vmem:[#allocation5 + $0x1150] sm:$0xff]
    %v617 = vld [vmem:[#allocation5 + $0x1158] sm:$0xff]
    %v618 = vld [vmem:[#allocation5 + $0x1160] sm:$0xff]
    %v619 = vld [vmem:[#allocation5 + $0x1168] sm:$0xff]
    %v620 = vld [vmem:[#allocation5 + $0x1170] sm:$0xff]
    %v621 = vld [vmem:[#allocation5 + $0x1178] sm:$0xff]
    %v622 = vld [vmem:[#allocation5 + $0x1180] sm:$0xff]
    %v623 = vld [vmem:[#allocation5 + $0x1188] sm:$0xff]
    %v624 = vld [vmem:[#allocation5 + $0x1190] sm:$0xff]
    %v625 = vld [vmem:[#allocation5 + $0x1198] sm:$0xff]
    %v626 = vld [vmem:[#allocation5 + $0x11a0] sm:$0xff]
    %v627 = vld [vmem:[#allocation5 + $0x11a8] sm:$0xff]
    %v628 = vld [vmem:[#allocation5 + $0x11b0] sm:$0xff]
    %v629 = vld [vmem:[#allocation5 + $0x11b8] sm:$0xff]
    %v630 = vld [vmem:[#allocation5 + $0x11c0] sm:$0xff]
    %v631 = vld [vmem:[#allocation5 + $0x11c8] sm:$0xff]
    %v632 = vld [vmem:[#allocation5 + $0x11d0] sm:$0xff]
    %v633 = vld [vmem:[#allocation5 + $0x11d8] sm:$0xff]
    %v634 = vld [vmem:[#allocation5 + $0x11e0] sm:$0xff]
    %v635 = vld [vmem:[#allocation5 + $0x11e8] sm:$0xff]
    %v636 = vld [vmem:[#allocation5 + $0x11f0] sm:$0xff]
    %v637 = vld [vmem:[#allocation5 + $0x11f8] sm:$0xff]
    %v638 = vld [vmem:[#allocation5 + $0x1200] sm:$0xff]
    %v639 = vld [vmem:[#allocation5 + $0x1208] sm:$0xff]
    %v640 = vld [vmem:[#allocation5 + $0x1210] sm:$0xff]
    %v641 = vld [vmem:[#allocation5 + $0x1218] sm:$0xff]
    %v642 = vld [vmem:[#allocation5 + $0x1220] sm:$0xff]
    %v643 = vld [vmem:[#allocation5 + $0x1228] sm:$0xff]
    %v644 = vld [vmem:[#allocation5 + $0x1230] sm:$0xff]
    %v645 = vld [vmem:[#allocation5 + $0x1238] sm:$0xff]
    %v646 = vld [vmem:[#allocation5 + $0x1240] sm:$0xff]
    %v647 = vld [vmem:[#allocation5 + $0x1248] sm:$0xff]
    %v648 = vld [vmem:[#allocation5 + $0x1250] sm:$0xff]
    %v649 = vld [vmem:[#allocation5 + $0x1258] sm:$0xff]
    %v650 = vld [vmem:[#allocation5 + $0x1260] sm:$0xff]
    %v651 = vld [vmem:[#allocation5 + $0x1268] sm:$0xff]
    %v652 = vld [vmem:[#allocation5 + $0x1270] sm:$0xff]
    %v653 = vld [vmem:[#allocation5 + $0x1278] sm:$0xff]
    %v654 = vld [vmem:[#allocation5 + $0x1280] sm:$0xff]
    %v655 = vld [vmem:[#allocation5 + $0x1288] sm:$0xff]
    %v656 = vld [vmem:[#allocation5 + $0x1290] sm:$0xff]
    %v657 = vld [vmem:[#allocation5 + $0x1298] sm:$0xff]
    %v658 = vld [vmem:[#allocation5 + $0x12a0] sm:$0xff]
    %v659 = vld [vmem:[#allocation5 + $0x12a8] sm:$0xff]
    %v660 = vld [vmem:[#allocation5 + $0x12b0] sm:$0xff]
    %v661 = vld [vmem:[#allocation5 + $0x12b8] sm:$0xff]
    %v662 = vld [vmem:[#allocation5 + $0x12c0] sm:$0xff]
    %v663 = vld [vmem:[#allocation5 + $0x12c8] sm:$0xff]
    %v664 = vld [vmem:[#allocation5 + $0x12d0] sm:$0xff]
    %v665 = vld [vmem:[#allocation5 + $0x12d8] sm:$0xff]
    %v666 = vld [vmem:[#allocation5 + $0x12e0] sm:$0xff]
    %v667 = vld [vmem:[#allocation5 + $0x12e8] sm:$0xff]
    %v668 = vld [vmem:[#allocation5 + $0x12f0] sm:$0xff]
    %v669 = vld [vmem:[#allocation5 + $0x12f8] sm:$0xff]
    %v670 = vld [vmem:[#allocation5 + $0x1300] sm:$0xff]
    %v671 = vld [vmem:[#allocation5 + $0x1308] sm:$0xff]
    %v672 = vld [vmem:[#allocation5 + $0x1310] sm:$0xff]
    %v673 = vld [vmem:[#allocation5 + $0x1318] sm:$0xff]
    %v674 = vld [vmem:[#allocation5 + $0x1320] sm:$0xff]
    %v675 = vld [vmem:[#allocation5 + $0x1328] sm:$0xff]
    %v676 = vld [vmem:[#allocation5 + $0x1330] sm:$0xff]
    %v677 = vld [vmem:[#allocation5 + $0x1338] sm:$0xff]
    %v678 = vld [vmem:[#allocation5 + $0x1340] sm:$0xff]
    %v679 = vld [vmem:[#allocation5 + $0x1348] sm:$0xff]
    %v680 = vld [vmem:[#allocation5 + $0x1350] sm:$0xff]
    %v681 = vld [vmem:[#allocation5 + $0x1358] sm:$0xff]
    %v682 = vld [vmem:[#allocation5 + $0x1360] sm:$0xff]
    %v683 = vld [vmem:[#allocation5 + $0x1368] sm:$0xff]
    %v684 = vld [vmem:[#allocation5 + $0x1370] sm:$0xff]
    %v685 = vld [vmem:[#allocation5 + $0x1378] sm:$0xff]
    %v686 = vld [vmem:[#allocation5 + $0x1380] sm:$0xff]
    %v687 = vld [vmem:[#allocation5 + $0x1388] sm:$0xff]
    %v688 = vld [vmem:[#allocation5 + $0x1390] sm:$0xff]
    %v689 = vld [vmem:[#allocation5 + $0x1398] sm:$0xff]
    %v690 = vld [vmem:[#allocation5 + $0x13a0] sm:$0xff]
    %v691 = vld [vmem:[#allocation5 + $0x13a8] sm:$0xff]
    %v692 = vld [vmem:[#allocation5 + $0x13b0] sm:$0xff]
    %v693 = vld [vmem:[#allocation5 + $0x13b8] sm:$0xff]
    %v694 = vld [vmem:[#allocation5 + $0x13c0] sm:$0xff]
    %v695 = vld [vmem:[#allocation5 + $0x13c8] sm:$0xff]
    %v696 = vld [vmem:[#allocation5 + $0x13d0] sm:$0xff]
    %v697 = vld [vmem:[#allocation5 + $0x13d8] sm:$0xff]
    %v698 = vld [vmem:[#allocation5 + $0x13e0] sm:$0xff]
    %v699 = vld [vmem:[#allocation5 + $0x13e8] sm:$0xff]
    %v700 = vld [vmem:[#allocation5 + $0x13f0] sm:$0xff]
    %v701 = vld [vmem:[#allocation5 + $0x13f8] sm:$0xff]
    %v702 = vld [vmem:[#allocation5 + $0x1400] sm:$0xff]
    %v703 = vld [vmem:[#allocation5 + $0x1408] sm:$0xff]
    %v704 = vld [vmem:[#allocation5 + $0x1410] sm:$0xff]
    %v705 = vld [vmem:[#allocation5 + $0x1418] sm:$0xff]
    %v706 = vld [vmem:[#allocation5 + $0x1420] sm:$0xff]
    %v707 = vld [vmem:[#allocation5 + $0x1428] sm:$0xff]
    %v708 = vld [vmem:[#allocation5 + $0x1430] sm:$0xff]
    %v709 = vld [vmem:[#allocation5 + $0x1438] sm:$0xff]
    %v710 = vld [vmem:[#allocation5 + $0x1440] sm:$0xff]
    %v711 = vld [vmem:[#allocation5 + $0x1448] sm:$0xff]
    %v712 = vld [vmem:[#allocation5 + $0x1450] sm:$0xff]
    %v713 = vld [vmem:[#allocation5 + $0x1458] sm:$0xff]
    %v714 = vld [vmem:[#allocation5 + $0x1460] sm:$0xff]
    %v715 = vld [vmem:[#allocation5 + $0x1468] sm:$0xff]
    %v716 = vld [vmem:[#allocation5 + $0x1470] sm:$0xff]
    %v717 = vld [vmem:[#allocation5 + $0x1478] sm:$0xff]
    %v718 = vld [vmem:[#allocation5 + $0x1480] sm:$0xff]
    %v719 = vld [vmem:[#allocation5 + $0x1488] sm:$0xff]
    %v720 = vld [vmem:[#allocation5 + $0x1490] sm:$0xff]
    %v721 = vld [vmem:[#allocation5 + $0x1498] sm:$0xff]
    %v722 = vld [vmem:[#allocation5 + $0x14a0] sm:$0xff]
    %v723 = vld [vmem:[#allocation5 + $0x14a8] sm:$0xff]
    %v724 = vld [vmem:[#allocation5 + $0x14b0] sm:$0xff]
    %v725 = vld [vmem:[#allocation5 + $0x14b8] sm:$0xff]
    %v726 = vld [vmem:[#allocation5 + $0x14c0] sm:$0xff]
    %v727 = vld [vmem:[#allocation5 + $0x14c8] sm:$0xff]
    %v728 = vld [vmem:[#allocation5 + $0x14d0] sm:$0xff]
    %v729 = vld [vmem:[#allocation5 + $0x14d8] sm:$0xff]
    %v730 = vld [vmem:[#allocation5 + $0x14e0] sm:$0xff]
    %v731 = vld [vmem:[#allocation5 + $0x14e8] sm:$0xff]
    %v732 = vld [vmem:[#allocation5 + $0x14f0] sm:$0xff]
    %v733 = vld [vmem:[#allocation5 + $0x14f8] sm:$0xff]
    %v734 = vld [vmem:[#allocation5 + $0x1500] sm:$0xff]
    %v735 = vld [vmem:[#allocation5 + $0x1508] sm:$0xff]
    %v736 = vld [vmem:[#allocation5 + $0x1510] sm:$0xff]
    %v737 = vld [vmem:[#allocation5 + $0x1518] sm:$0xff]
    %v738 = vld [vmem:[#allocation5 + $0x1520] sm:$0xff]
    %v739 = vld [vmem:[#allocation5 + $0x1528] sm:$0xff]
    %v740 = vld [vmem:[#allocation5 + $0x1530] sm:$0xff]
    %v741 = vld [vmem:[#allocation5 + $0x1538] sm:$0xff]
    %v742 = vld [vmem:[#allocation5 + $0x1540] sm:$0xff]
    %v743 = vld [vmem:[#allocation5 + $0x1548] sm:$0xff]
    %v744 = vld [vmem:[#allocation5 + $0x1550] sm:$0xff]
    %v745 = vld [vmem:[#allocation5 + $0x1558] sm:$0xff]
    %v746 = vld [vmem:[#allocation5 + $0x1560] sm:$0xff]
    %v747 = vld [vmem:[#allocation5 + $0x1568] sm:$0xff]
    %v748 = vld [vmem:[#allocation5 + $0x1570] sm:$0xff]
    %v749 = vld [vmem:[#allocation5 + $0x1578] sm:$0xff]
    %v750 = vld [vmem:[#allocation5 + $0x1580] sm:$0xff]
    %v751 = vld [vmem:[#allocation5 + $0x1588] sm:$0xff]
    %v752 = vld [vmem:[#allocation5 + $0x1590] sm:$0xff]
    %v753 = vld [vmem:[#allocation5 + $0x1598] sm:$0xff]
    %v754 = vld [vmem:[#allocation5 + $0x15a0] sm:$0xff]
    %v755 = vld [vmem:[#allocation5 + $0x15a8] sm:$0xff]
    %v756 = vld [vmem:[#allocation5 + $0x15b0] sm:$0xff]
    %v757 = vld [vmem:[#allocation5 + $0x15b8] sm:$0xff]
    %v758 = vld [vmem:[#allocation5 + $0x15c0] sm:$0xff]
    %v759 = vld [vmem:[#allocation5 + $0x15c8] sm:$0xff]
    %v760 = vld [vmem:[#allocation5 + $0x15d0] sm:$0xff]
    %v761 = vld [vmem:[#allocation5 + $0x15d8] sm:$0xff]
    %v762 = vld [vmem:[#allocation5 + $0x15e0] sm:$0xff]
    %v763 = vld [vmem:[#allocation5 + $0x15e8] sm:$0xff]
    %v764 = vld [vmem:[#allocation5 + $0x15f0] sm:$0xff]
    %v765 = vld [vmem:[#allocation5 + $0x15f8] sm:$0xff]
    %v766 = vld [vmem:[#allocation5 + $0x1600] sm:$0xff]
    %v767 = vld [vmem:[#allocation5 + $0x1608] sm:$0xff]
    %v768 = vld [vmem:[#allocation5 + $0x1610] sm:$0xff]
    %v769 = vld [vmem:[#allocation5 + $0x1618] sm:$0xff]
    %v770 = vld [vmem:[#allocation5 + $0x1620] sm:$0xff]
    %v771 = vld [vmem:[#allocation5 + $0x1628] sm:$0xff]
    %v772 = vld [vmem:[#allocation5 + $0x1630] sm:$0xff]
    %v773 = vld [vmem:[#allocation5 + $0x1638] sm:$0xff]
    %v774 = vld [vmem:[#allocation5 + $0x1640] sm:$0xff]
    %v775 = vld [vmem:[#allocation5 + $0x1648] sm:$0xff]
    %v776 = vld [vmem:[#allocation5 + $0x1650] sm:$0xff]
    %v777 = vld [vmem:[#allocation5 + $0x1658] sm:$0xff]
    %v778 = vld [vmem:[#allocation5 + $0x1660] sm:$0xff]
    %v779 = vld [vmem:[#allocation5 + $0x1668] sm:$0xff]
    %v780 = vld [vmem:[#allocation5 + $0x1670] sm:$0xff]
    %v781 = vld [vmem:[#allocation5 + $0x1678] sm:$0xff]
    %v782 = vld [vmem:[#allocation5 + $0x1680] sm:$0xff]
    %v783 = vld [vmem:[#allocation5 + $0x1688] sm:$0xff]
    %v784 = vld [vmem:[#allocation5 + $0x1690] sm:$0xff]
    %v785 = vld [vmem:[#allocation5 + $0x1698] sm:$0xff]
    %v786 = vld [vmem:[#allocation5 + $0x16a0] sm:$0xff]
    %v787 = vld [vmem:[#allocation5 + $0x16a8] sm:$0xff]
    %v788 = vld [vmem:[#allocation5 + $0x16b0] sm:$0xff]
    %v789 = vld [vmem:[#allocation5 + $0x16b8] sm:$0xff]
    %v790 = vld [vmem:[#allocation5 + $0x16c0] sm:$0xff]
    %v791 = vld [vmem:[#allocation5 + $0x16c8] sm:$0xff]
    %v792 = vld [vmem:[#allocation5 + $0x16d0] sm:$0xff]
    %v793 = vld [vmem:[#allocation5 + $0x16d8] sm:$0xff]
    %v794 = vld [vmem:[#allocation5 + $0x16e0] sm:$0xff]
    %v795 = vld [vmem:[#allocation5 + $0x16e8] sm:$0xff]
    %v796 = vld [vmem:[#allocation5 + $0x16f0] sm:$0xff]
    %v797 = vld [vmem:[#allocation5 + $0x16f8] sm:$0xff]
    %v798 = vld [vmem:[#allocation5 + $0x1700] sm:$0xff]
    %v799 = vld [vmem:[#allocation5 + $0x1708] sm:$0xff]
    %v800 = vld [vmem:[#allocation5 + $0x1710] sm:$0xff]
    %v801 = vld [vmem:[#allocation5 + $0x1718] sm:$0xff]
    %v802 = vld [vmem:[#allocation5 + $0x1720] sm:$0xff]
    %v803 = vld [vmem:[#allocation5 + $0x1728] sm:$0xff]
    %v804 = vld [vmem:[#allocation5 + $0x1730] sm:$0xff]
    %v805 = vld [vmem:[#allocation5 + $0x1738] sm:$0xff]
    %v806 = vld [vmem:[#allocation5 + $0x1740] sm:$0xff]
    %v807 = vld [vmem:[#allocation5 + $0x1748] sm:$0xff]
    %v808 = vld [vmem:[#allocation5 + $0x1750] sm:$0xff]
    %v809 = vld [vmem:[#allocation5 + $0x1758] sm:$0xff]
    %v810 = vld [vmem:[#allocation5 + $0x1760] sm:$0xff]
    %v811 = vld [vmem:[#allocation5 + $0x1768] sm:$0xff]
    %v812 = vld [vmem:[#allocation5 + $0x1770] sm:$0xff]
    %v813 = vld [vmem:[#allocation5 + $0x1778] sm:$0xff]
    %v814 = vld [vmem:[#allocation5 + $0x1780] sm:$0xff]
    %v815 = vld [vmem:[#allocation5 + $0x1788] sm:$0xff]
    %v816 = vld [vmem:[#allocation5 + $0x1790] sm:$0xff]
    %v817 = vld [vmem:[#allocation5 + $0x1798] sm:$0xff]
    %v818 = vld [vmem:[#allocation5 + $0x17a0] sm:$0xff]
    %v819 = vld [vmem:[#allocation5 + $0x17a8] sm:$0xff]
    %v820 = vld [vmem:[#allocation5 + $0x17b0] sm:$0xff]
    %v821 = vld [vmem:[#allocation5 + $0x17b8] sm:$0xff]
    %v822 = vld [vmem:[#allocation5 + $0x17c0] sm:$0xff]
    %v823 = vld [vmem:[#allocation5 + $0x17c8] sm:$0xff]
    %v824 = vld [vmem:[#allocation5 + $0x17d0] sm:$0xff]
    %v825 = vld [vmem:[#allocation5 + $0x17d8] sm:$0xff]
    %v826 = vld [vmem:[#allocation5 + $0x17e0] sm:$0xff]
    %v827 = vld [vmem:[#allocation5 + $0x17e8] sm:$0xff]
    %v828 = vld [vmem:[#allocation5 + $0x17f0] sm:$0xff]
    %v829 = vld [vmem:[#allocation5 + $0x17f8] sm:$0xff]
    %v830 = vld [vmem:[#allocation5 + $0x1800] sm:$0xff]
    %v831 = vld [vmem:[#allocation5 + $0x1808] sm:$0xff]
    %v832 = vld [vmem:[#allocation5 + $0x1810] sm:$0xff]
    %v833 = vld [vmem:[#allocation5 + $0x1818] sm:$0xff]
    %v834 = vld [vmem:[#allocation5 + $0x1820] sm:$0xff]
    %v835 = vld [vmem:[#allocation5 + $0x1828] sm:$0xff]
    %v836 = vld [vmem:[#allocation5 + $0x1830] sm:$0xff]
    %v837 = vld [vmem:[#allocation5 + $0x1838] sm:$0xff]
    %v838 = vld [vmem:[#allocation5 + $0x1840] sm:$0xff]
    %v839 = vld [vmem:[#allocation5 + $0x1848] sm:$0xff]
    %v840 = vld [vmem:[#allocation5 + $0x1850] sm:$0xff]
    %v841 = vld [vmem:[#allocation5 + $0x1858] sm:$0xff]
    %v842 = vld [vmem:[#allocation5 + $0x1860] sm:$0xff]
    %v843 = vld [vmem:[#allocation5 + $0x1868] sm:$0xff]
    %v844 = vld [vmem:[#allocation5 + $0x1870] sm:$0xff]
    %v845 = vld [vmem:[#allocation5 + $0x1878] sm:$0xff]
    %v846 = vld [vmem:[#allocation5 + $0x1880] sm:$0xff]
    %v847 = vld [vmem:[#allocation5 + $0x1888] sm:$0xff]
    %v848 = vld [vmem:[#allocation5 + $0x1890] sm:$0xff]
    %v849 = vld [vmem:[#allocation5 + $0x1898] sm:$0xff]
    %v850 = vld [vmem:[#allocation5 + $0x18a0] sm:$0xff]
    %v851 = vld [vmem:[#allocation5 + $0x18a8] sm:$0xff]
    %v852 = vld [vmem:[#allocation5 + $0x18b0] sm:$0xff]
    %v853 = vld [vmem:[#allocation5 + $0x18b8] sm:$0xff]
    %v854 = vld [vmem:[#allocation5 + $0x18c0] sm:$0xff]
    %v855 = vld [vmem:[#allocation5 + $0x18c8] sm:$0xff]
    %v856 = vld [vmem:[#allocation5 + $0x18d0] sm:$0xff]
    %v857 = vld [vmem:[#allocation5 + $0x18d8] sm:$0xff]
    %v858 = vld [vmem:[#allocation5 + $0x18e0] sm:$0xff]
    %v859 = vld [vmem:[#allocation5 + $0x18e8] sm:$0xff]
    %v860 = vld [vmem:[#allocation5 + $0x18f0] sm:$0xff]
    %v861 = vld [vmem:[#allocation5 + $0x18f8] sm:$0xff]
    %v862 = vld [vmem:[#allocation5 + $0x1900] sm:$0xff]
    %v863 = vld [vmem:[#allocation5 + $0x1908] sm:$0xff]
    %v864 = vld [vmem:[#allocation5 + $0x1910] sm:$0xff]
    %v865 = vld [vmem:[#allocation5 + $0x1918] sm:$0xff]
    %v866 = vld [vmem:[#allocation5 + $0x1920] sm:$0xff]
    %v867 = vld [vmem:[#allocation5 + $0x1928] sm:$0xff]
    %v868 = vld [vmem:[#allocation5 + $0x1930] sm:$0xff]
    %v869 = vld [vmem:[#allocation5 + $0x1938] sm:$0xff]
    %v870 = vld [vmem:[#allocation5 + $0x1940] sm:$0xff]
    %v871 = vld [vmem:[#allocation5 + $0x1948] sm:$0xff]
    %v872 = vld [vmem:[#allocation5 + $0x1950] sm:$0xff]
    %v873 = vld [vmem:[#allocation5 + $0x1958] sm:$0xff]
    %v874 = vld [vmem:[#allocation5 + $0x1960] sm:$0xff]
    %v875 = vld [vmem:[#allocation5 + $0x1968] sm:$0xff]
    %v876 = vld [vmem:[#allocation5 + $0x1970] sm:$0xff]
    %v877 = vld [vmem:[#allocation5 + $0x1978] sm:$0xff]
    %v878 = vld [vmem:[#allocation5 + $0x1980] sm:$0xff]
    %v879 = vld [vmem:[#allocation5 + $0x1988] sm:$0xff]
    %v880 = vld [vmem:[#allocation5 + $0x1990] sm:$0xff]
    %v881 = vld [vmem:[#allocation5 + $0x1998] sm:$0xff]
    %v882 = vld [vmem:[#allocation5 + $0x19a0] sm:$0xff]
    %v883 = vld [vmem:[#allocation5 + $0x19a8] sm:$0xff]
    %v884 = vld [vmem:[#allocation5 + $0x19b0] sm:$0xff]
    %v885 = vld [vmem:[#allocation5 + $0x19b8] sm:$0xff]
    %v886 = vld [vmem:[#allocation5 + $0x19c0] sm:$0xff]
    %v887 = vld [vmem:[#allocation5 + $0x19c8] sm:$0xff]
    %v888 = vld [vmem:[#allocation5 + $0x19d0] sm:$0xff]
    %v889 = vld [vmem:[#allocation5 + $0x19d8] sm:$0xff]
    %v890 = vld [vmem:[#allocation5 + $0x19e0] sm:$0xff]
    %v891 = vld [vmem:[#allocation5 + $0x19e8] sm:$0xff]
    %v892 = vld [vmem:[#allocation5 + $0x19f0] sm:$0xff]
    %v893 = vld [vmem:[#allocation5 + $0x19f8] sm:$0xff]
    %v894 = vld [vmem:[#allocation5 + $0x1a00] sm:$0xff]
    %v895 = vld [vmem:[#allocation5 + $0x1a08] sm:$0xff]
    %v896 = vld [vmem:[#allocation5 + $0x1a10] sm:$0xff]
    %v897 = vld [vmem:[#allocation5 + $0x1a18] sm:$0xff]
    %v898 = vld [vmem:[#allocation5 + $0x1a20] sm:$0xff]
    %v899 = vld [vmem:[#allocation5 + $0x1a28] sm:$0xff]
    %v900 = vld [vmem:[#allocation5 + $0x1a30] sm:$0xff]
    %v901 = vld [vmem:[#allocation5 + $0x1a38] sm:$0xff]
    %v902 = vld [vmem:[#allocation5 + $0x1a40] sm:$0xff]
    %v903 = vld [vmem:[#allocation5 + $0x1a48] sm:$0xff]
    %v904 = vld [vmem:[#allocation5 + $0x1a50] sm:$0xff]
    %v905 = vld [vmem:[#allocation5 + $0x1a58] sm:$0xff]
    %v906 = vld [vmem:[#allocation5 + $0x1a60] sm:$0xff]
    %v907 = vld [vmem:[#allocation5 + $0x1a68] sm:$0xff]
    %v908 = vld [vmem:[#allocation5 + $0x1a70] sm:$0xff]
    %v909 = vld [vmem:[#allocation5 + $0x1a78] sm:$0xff]
    %v910 = vld [vmem:[#allocation5 + $0x1a80] sm:$0xff]
    %v911 = vld [vmem:[#allocation5 + $0x1a88] sm:$0xff]
    %v912 = vld [vmem:[#allocation5 + $0x1a90] sm:$0xff]
    %v913 = vld [vmem:[#allocation5 + $0x1a98] sm:$0xff]
    %v914 = vld [vmem:[#allocation5 + $0x1aa0] sm:$0xff]
    %v915 = vld [vmem:[#allocation5 + $0x1aa8] sm:$0xff]
    %v916 = vld [vmem:[#allocation5 + $0x1ab0] sm:$0xff]
    %v917 = vld [vmem:[#allocation5 + $0x1ab8] sm:$0xff]
    %v918 = vld [vmem:[#allocation5 + $0x1ac0] sm:$0xff]
    %v919 = vld [vmem:[#allocation5 + $0x1ac8] sm:$0xff]
    %v920 = vld [vmem:[#allocation5 + $0x1ad0] sm:$0xff]
    %v921 = vld [vmem:[#allocation5 + $0x1ad8] sm:$0xff]
    %v922 = vld [vmem:[#allocation5 + $0x1ae0] sm:$0xff]
    %v923 = vld [vmem:[#allocation5 + $0x1ae8] sm:$0xff]
    %v924 = vld [vmem:[#allocation5 + $0x1af0] sm:$0xff]
    %v925 = vld [vmem:[#allocation5 + $0x1af8] sm:$0xff]
    %v926 = vld [vmem:[#allocation5 + $0x1b00] sm:$0xff]
    %v927 = vld [vmem:[#allocation5 + $0x1b08] sm:$0xff]
    %v928 = vld [vmem:[#allocation5 + $0x1b10] sm:$0xff]
    %v929 = vld [vmem:[#allocation5 + $0x1b18] sm:$0xff]
    %v930 = vld [vmem:[#allocation5 + $0x1b20] sm:$0xff]
    %v931 = vld [vmem:[#allocation5 + $0x1b28] sm:$0xff]
    %v932 = vld [vmem:[#allocation5 + $0x1b30] sm:$0xff]
    %v933 = vld [vmem:[#allocation5 + $0x1b38] sm:$0xff]
    %v934 = vld [vmem:[#allocation5 + $0x1b40] sm:$0xff]
    %v935 = vld [vmem:[#allocation5 + $0x1b48] sm:$0xff]
    %v936 = vld [vmem:[#allocation5 + $0x1b50] sm:$0xff]
    %v937 = vld [vmem:[#allocation5 + $0x1b58] sm:$0xff]
    %v938 = vld [vmem:[#allocation5 + $0x1b60] sm:$0xff]
    %v939 = vld [vmem:[#allocation5 + $0x1b68] sm:$0xff]
    %v940 = vld [vmem:[#allocation5 + $0x1b70] sm:$0xff]
    %v941 = vld [vmem:[#allocation5 + $0x1b78] sm:$0xff]
    %v942 = vld [vmem:[#allocation5 + $0x1b80] sm:$0xff]
    %v943 = vld [vmem:[#allocation5 + $0x1b88] sm:$0xff]
    %v944 = vld [vmem:[#allocation5 + $0x1b90] sm:$0xff]
    %v945 = vld [vmem:[#allocation5 + $0x1b98] sm:$0xff]
    %v946 = vld [vmem:[#allocation5 + $0x1ba0] sm:$0xff]
    %v947 = vld [vmem:[#allocation5 + $0x1ba8] sm:$0xff]
    %v948 = vld [vmem:[#allocation5 + $0x1bb0] sm:$0xff]
    %v949 = vld [vmem:[#allocation5 + $0x1bb8] sm:$0xff]
    %v950 = vld [vmem:[#allocation5 + $0x1bc0] sm:$0xff]
    %v951 = vld [vmem:[#allocation5 + $0x1bc8] sm:$0xff]
    %v952 = vld [vmem:[#allocation5 + $0x1bd0] sm:$0xff]
    %v953 = vld [vmem:[#allocation5 + $0x1bd8] sm:$0xff]
    %v954 = vld [vmem:[#allocation5 + $0x1be0] sm:$0xff]
    %v955 = vld [vmem:[#allocation5 + $0x1be8] sm:$0xff]
    %v956 = vld [vmem:[#allocation5 + $0x1bf0] sm:$0xff]
    %v957 = vld [vmem:[#allocation5 + $0x1bf8] sm:$0xff]
    %v958 = vld [vmem:[#allocation5 + $0x1c00] sm:$0xff]
    %v959 = vld [vmem:[#allocation5 + $0x1c08] sm:$0xff]
    %v960 = vld [vmem:[#allocation5 + $0x1c10] sm:$0xff]
    %v961 = vld [vmem:[#allocation5 + $0x1c18] sm:$0xff]
    %v962 = vld [vmem:[#allocation5 + $0x1c20] sm:$0xff]
    %v963 = vld [vmem:[#allocation5 + $0x1c28] sm:$0xff]
    %v964 = vld [vmem:[#allocation5 + $0x1c30] sm:$0xff]
    %v965 = vld [vmem:[#allocation5 + $0x1c38] sm:$0xff]
    %v966 = vld [vmem:[#allocation5 + $0x1c40] sm:$0xff]
    %v967 = vld [vmem:[#allocation5 + $0x1c48] sm:$0xff]
    %v968 = vld [vmem:[#allocation5 + $0x1c50] sm:$0xff]
    %v969 = vld [vmem:[#allocation5 + $0x1c58] sm:$0xff]
    %v970 = vld [vmem:[#allocation5 + $0x1c60] sm:$0xff]
    %v971 = vld [vmem:[#allocation5 + $0x1c68] sm:$0xff]
    %v972 = vld [vmem:[#allocation5 + $0x1c70] sm:$0xff]
    %v973 = vld [vmem:[#allocation5 + $0x1c78] sm:$0xff]
    %v974 = vld [vmem:[#allocation5 + $0x1c80] sm:$0xff]
    %v975 = vld [vmem:[#allocation5 + $0x1c88] sm:$0xff]
    %v976 = vld [vmem:[#allocation5 + $0x1c90] sm:$0xff]
    %v977 = vld [vmem:[#allocation5 + $0x1c98] sm:$0xff]
    %v978 = vld [vmem:[#allocation5 + $0x1ca0] sm:$0xff]
    %v979 = vld [vmem:[#allocation5 + $0x1ca8] sm:$0xff]
    %v980 = vld [vmem:[#allocation5 + $0x1cb0] sm:$0xff]
    %v981 = vld [vmem:[#allocation5 + $0x1cb8] sm:$0xff]
    %v982 = vld [vmem:[#allocation5 + $0x1cc0] sm:$0xff]
    %v983 = vld [vmem:[#allocation5 + $0x1cc8] sm:$0xff]
    %v984 = vld [vmem:[#allocation5 + $0x1cd0] sm:$0xff]
    %v985 = vld [vmem:[#allocation5 + $0x1cd8] sm:$0xff]
    %v986 = vld [vmem:[#allocation5 + $0x1ce0] sm:$0xff]
    %v987 = vld [vmem:[#allocation5 + $0x1ce8] sm:$0xff]
    %v988 = vld [vmem:[#allocation5 + $0x1cf0] sm:$0xff]
    %v989 = vld [vmem:[#allocation5 + $0x1cf8] sm:$0xff]
    %v990 = vld [vmem:[#allocation5 + $0x1d00] sm:$0xff]
    %v991 = vld [vmem:[#allocation5 + $0x1d08] sm:$0xff]
    %v992 = vld [vmem:[#allocation5 + $0x1d10] sm:$0xff]
    %v993 = vld [vmem:[#allocation5 + $0x1d18] sm:$0xff]
    %v994 = vld [vmem:[#allocation5 + $0x1d20] sm:$0xff]
    %v995 = vld [vmem:[#allocation5 + $0x1d28] sm:$0xff]
    %v996 = vld [vmem:[#allocation5 + $0x1d30] sm:$0xff]
    %v997 = vld [vmem:[#allocation5 + $0x1d38] sm:$0xff]
    %v998 = vld [vmem:[#allocation5 + $0x1d40] sm:$0xff]
    %v999 = vld [vmem:[#allocation5 + $0x1d48] sm:$0xff]
    %v1000 = vld [vmem:[#allocation5 + $0x1d50] sm:$0xff]
    %v1001 = vld [vmem:[#allocation5 + $0x1d58] sm:$0xff]
    %v1002 = vld [vmem:[#allocation5 + $0x1d60] sm:$0xff]
    %v1003 = vld [vmem:[#allocation5 + $0x1d68] sm:$0xff]
    %v1004 = vld [vmem:[#allocation5 + $0x1d70] sm:$0xff]
    %v1005 = vld [vmem:[#allocation5 + $0x1d78] sm:$0xff]
    %v1006 = vld [vmem:[#allocation5 + $0x1d80] sm:$0xff]
    %v1007 = vld [vmem:[#allocation5 + $0x1d88] sm:$0xff]
    %v1008 = vld [vmem:[#allocation5 + $0x1d90] sm:$0xff]
    %v1009 = vld [vmem:[#allocation5 + $0x1d98] sm:$0xff]
    %v1010 = vld [vmem:[#allocation5 + $0x1da0] sm:$0xff]
    %v1011 = vld [vmem:[#allocation5 + $0x1da8] sm:$0xff]
    %v1012 = vld [vmem:[#allocation5 + $0x1db0] sm:$0xff]
    %v1013 = vld [vmem:[#allocation5 + $0x1db8] sm:$0xff]
    %v1014 = vld [vmem:[#allocation5 + $0x1dc0] sm:$0xff]
    %v1015 = vld [vmem:[#allocation5 + $0x1dc8] sm:$0xff]
    %v1016 = vld [vmem:[#allocation5 + $0x1dd0] sm:$0xff]
    %v1017 = vld [vmem:[#allocation5 + $0x1dd8] sm:$0xff]
    %v1018 = vld [vmem:[#allocation5 + $0x1de0] sm:$0xff]
    %v1019 = vld [vmem:[#allocation5 + $0x1de8] sm:$0xff]
    %v1020 = vld [vmem:[#allocation5 + $0x1df0] sm:$0xff]
    %v1021 = vld [vmem:[#allocation5 + $0x1df8] sm:$0xff]
    %v1022 = vld [vmem:[#allocation5 + $0x1e00] sm:$0xff]
    %v1023 = vld [vmem:[#allocation5 + $0x1e08] sm:$0xff]
    %v1024 = vld [vmem:[#allocation5 + $0x1e10] sm:$0xff]
    %v1025 = vld [vmem:[#allocation5 + $0x1e18] sm:$0xff]
    %v1026 = vld [vmem:[#allocation5 + $0x1e20] sm:$0xff]
    %v1027 = vld [vmem:[#allocation5 + $0x1e28] sm:$0xff]
    %v1028 = vld [vmem:[#allocation5 + $0x1e30] sm:$0xff]
    %v1029 = vld [vmem:[#allocation5 + $0x1e38] sm:$0xff]
    %v1030 = vld [vmem:[#allocation5 + $0x1e40] sm:$0xff]
    %v1031 = vld [vmem:[#allocation5 + $0x1e48] sm:$0xff]
    %v1032 = vld [vmem:[#allocation5 + $0x1e50] sm:$0xff]
    %v1033 = vld [vmem:[#allocation5 + $0x1e58] sm:$0xff]
    %v1034 = vld [vmem:[#allocation5 + $0x1e60] sm:$0xff]
    %v1035 = vld [vmem:[#allocation5 + $0x1e68] sm:$0xff]
    %v1036 = vld [vmem:[#allocation5 + $0x1e70] sm:$0xff]
    %v1037 = vld [vmem:[#allocation5 + $0x1e78] sm:$0xff]
    %v1038 = vld [vmem:[#allocation5 + $0x1e80] sm:$0xff]
    %v1039 = vld [vmem:[#allocation5 + $0x1e88] sm:$0xff]
    %v1040 = vld [vmem:[#allocation5 + $0x1e90] sm:$0xff]
    %v1041 = vld [vmem:[#allocation5 + $0x1e98] sm:$0xff]
    %v1042 = vld [vmem:[#allocation5 + $0x1ea0] sm:$0xff]
    %v1043 = vld [vmem:[#allocation5 + $0x1ea8] sm:$0xff]
    %v1044 = vld [vmem:[#allocation5 + $0x1eb0] sm:$0xff]
    %v1045 = vld [vmem:[#allocation5 + $0x1eb8] sm:$0xff]
    %v1046 = vld [vmem:[#allocation5 + $0x1ec0] sm:$0xff]
    %v1047 = vld [vmem:[#allocation5 + $0x1ec8] sm:$0xff]
    %v1048 = vld [vmem:[#allocation5 + $0x1ed0] sm:$0xff]
    %v1049 = vld [vmem:[#allocation5 + $0x1ed8] sm:$0xff]
    %v1050 = vld [vmem:[#allocation5 + $0x1ee0] sm:$0xff]
    %v1051 = vld [vmem:[#allocation5 + $0x1ee8] sm:$0xff]
    %v1052 = vld [vmem:[#allocation5 + $0x1ef0] sm:$0xff]
    %v1053 = vld [vmem:[#allocation5 + $0x1ef8] sm:$0xff]
    %v1054 = vld [vmem:[#allocation5 + $0x1f00] sm:$0xff]
    %v1055 = vld [vmem:[#allocation5 + $0x1f08] sm:$0xff]
    %v1056 = vld [vmem:[#allocation5 + $0x1f10] sm:$0xff]
    %v1057 = vld [vmem:[#allocation5 + $0x1f18] sm:$0xff]
    %v1058 = vld [vmem:[#allocation5 + $0x1f20] sm:$0xff]
    %v1059 = vld [vmem:[#allocation5 + $0x1f28] sm:$0xff]
    %v1060 = vld [vmem:[#allocation5 + $0x1f30] sm:$0xff]
    %v1061 = vld [vmem:[#allocation5 + $0x1f38] sm:$0xff]
    %v1062 = vld [vmem:[#allocation5 + $0x1f40] sm:$0xff]
    %v1063 = vld [vmem:[#allocation5 + $0x1f48] sm:$0xff]
    %v1064 = vld [vmem:[#allocation5 + $0x1f50] sm:$0xff]
    %v1065 = vld [vmem:[#allocation5 + $0x1f58] sm:$0xff]
    %v1066 = vld [vmem:[#allocation5 + $0x1f60] sm:$0xff]
    %v1067 = vld [vmem:[#allocation5 + $0x1f68] sm:$0xff]
    %v1068 = vld [vmem:[#allocation5 + $0x1f70] sm:$0xff]
    %v1069 = vld [vmem:[#allocation5 + $0x1f78] sm:$0xff]
    %v1070 = vld [vmem:[#allocation5 + $0x1f80] sm:$0xff]
    %v1071 = vld [vmem:[#allocation5 + $0x1f88] sm:$0xff]
    %v1072 = vld [vmem:[#allocation5 + $0x1f90] sm:$0xff]
    %v1073 = vld [vmem:[#allocation5 + $0x1f98] sm:$0xff]
    %v1074 = vld [vmem:[#allocation5 + $0x1fa0] sm:$0xff]
    %v1075 = vld [vmem:[#allocation5 + $0x1fa8] sm:$0xff]
    %v1076 = vld [vmem:[#allocation5 + $0x1fb0] sm:$0xff]
    %v1077 = vld [vmem:[#allocation5 + $0x1fb8] sm:$0xff]
    %v1078 = vld [vmem:[#allocation5 + $0x1fc0] sm:$0xff]
    %v1079 = vld [vmem:[#allocation5 + $0x1fc8] sm:$0xff]
    %v1080 = vld [vmem:[#allocation5 + $0x1fd0] sm:$0xff]
    %v1081 = vld [vmem:[#allocation5 + $0x1fd8] sm:$0xff]
    %v1082 = vld [vmem:[#allocation5 + $0x1fe0] sm:$0xff]
    %v1083 = vld [vmem:[#allocation5 + $0x1fe8] sm:$0xff]
    %v1084 = vld [vmem:[#allocation5 + $0x1ff0] sm:$0xff]
    %v1085 = vld [vmem:[#allocation5 + $0x1ff8] sm:$0xff]
    %v1086 = vld [vmem:[#allocation7] sm:$0xff]
    %v1088 = vperm.slane %v1086, 0
    %v1089 = vperm.slane %v1086, 1
    %v1090 = vperm.slane %v1086, 2
    %v1091 = vperm.slane %v1086, 3
    %v1092 = vperm.slane %v1086, 4
    %v1093 = vperm.slane %v1086, 5
    %v1094 = vperm.slane %v1086, 6
    %v1095 = vperm.slane %v1086, 7
    %1108 = vst [vmem:[#allocation1] ss:$2 sm:$0xff] %v58
    %s1109 = scalar_lea.vmem [#allocation1], 16
    %1110 = vst [vmem:[%s1109] ss:$2 sm:$0xff] %v59
    %s1111 = scalar_lea.vmem [#allocation1], 32
    %1112 = vst [vmem:[%s1111] ss:$2 sm:$0xff] %v60
    %s1113 = scalar_lea.vmem [#allocation1], 48
    %1114 = vst [vmem:[%s1113] ss:$2 sm:$0xff] %v61
    %v1115 = vld.sshfl [vmem:[#allocation1] sm:$0xff pattern:$0x75316420]
    %v1116 = vld.sshfl [vmem:[#allocation1 + $0x8] sm:$0xff pattern:$0x75316420]
    %v1117 = vld.sshfl [vmem:[#allocation1 + $0x10] sm:$0xff pattern:$0x75316420]
    %v1118 = vld.sshfl [vmem:[#allocation1 + $0x18] sm:$0xff pattern:$0x75316420]
    %v1119 = vld.sshfl [vmem:[#allocation1 + $0x20] sm:$0xff pattern:$0x75316420]
    %v1120 = vld.sshfl [vmem:[#allocation1 + $0x28] sm:$0xff pattern:$0x75316420]
    %v1121 = vld.sshfl [vmem:[#allocation1 + $0x30] sm:$0xff pattern:$0x75316420]
    %v1122 = vld.sshfl [vmem:[#allocation1 + $0x38] sm:$0xff pattern:$0x75316420]
    %1131 = vmatpush.xpose.msra.mxu0 %v182
    %1132 = vmatpush.xpose.msra.mxu0 %v174
    %1133 = vmatpush.xpose.msra.mxu0 %v166
    %1134 = vmatpush.xpose.msra.mxu0 %v158
    %1135 = vmatpush.xpose.msra.mxu0 %v150
    %1136 = vmatpush.xpose.msra.mxu0 %v142
    %1137 = vmatpush.xpose.msra.mxu0 %v134
    %1138 = vmatpush.xpose.msra.mxu0 %v126
    %1139 = vmatpush.xpose.msra.mxu0 %v118
    %1140 = vmatpush.xpose.msra.mxu0 %v110
    %1141 = vmatpush.xpose.msra.mxu0 %v102
    %1142 = vmatpush.xpose.msra.mxu0 %v94
    %1143 = vmatpush.xpose.msra.mxu0 %v86
    %1144 = vmatpush.xpose.msra.mxu0 %v78
    %1145 = vmatpush.xpose.msra.mxu0 %v70
    %1146 = vmatpush.xpose.msra.mxu0 %v62
    %1147 = vmatmul.f32.gmra.mxu0 %v1115
    %v1148 = vpop.f32.mrf.mxu0
    %v1149 = vadd.f32 %v1088, %v1148
    %1150 = vdwg.mxu0
    %1151 = vmatpush.xpose.msra.mxu0 %v183
    %1152 = vmatpush.xpose.msra.mxu0 %v175
    %1153 = vmatpush.xpose.msra.mxu0 %v167
    %1154 = vmatpush.xpose.msra.mxu0 %v159
    %1155 = vmatpush.xpose.msra.mxu0 %v151
    %1156 = vmatpush.xpose.msra.mxu0 %v143
    %1157 = vmatpush.xpose.msra.mxu0 %v135
    %1158 = vmatpush.xpose.msra.mxu0 %v127
    %1159 = vmatpush.xpose.msra.mxu0 %v119
    %1160 = vmatpush.xpose.msra.mxu0 %v111
    %1161 = vmatpush.xpose.msra.mxu0 %v103
    %1162 = vmatpush.xpose.msra.mxu0 %v95
    %1163 = vmatpush.xpose.msra.mxu0 %v87
    %1164 = vmatpush.xpose.msra.mxu0 %v79
    %1165 = vmatpush.xpose.msra.mxu0 %v71
    %1166 = vmatpush.xpose.msra.mxu0 %v63
    %1167 = vmatmul.f32.gmra.mxu0 %v1116
    %v1168 = vpop.f32.mrf.mxu0
    %v1169 = vadd.f32 %v1149, %v1168
    %1170 = vdwg.mxu0
    %1171 = vmatpush.xpose.msra.mxu0 %v184
    %1172 = vmatpush.xpose.msra.mxu0 %v176
    %1173 = vmatpush.xpose.msra.mxu0 %v168
    %1174 = vmatpush.xpose.msra.mxu0 %v160
    %1175 = vmatpush.xpose.msra.mxu0 %v152
    %1176 = vmatpush.xpose.msra.mxu0 %v144
    %1177 = vmatpush.xpose.msra.mxu0 %v136
    %1178 = vmatpush.xpose.msra.mxu0 %v128
    %1179 = vmatpush.xpose.msra.mxu0 %v120
    %1180 = vmatpush.xpose.msra.mxu0 %v112
    %1181 = vmatpush.xpose.msra.mxu0 %v104
    %1182 = vmatpush.xpose.msra.mxu0 %v96
    %1183 = vmatpush.xpose.msra.mxu0 %v88
    %1184 = vmatpush.xpose.msra.mxu0 %v80
    %1185 = vmatpush.xpose.msra.mxu0 %v72
    %1186 = vmatpush.xpose.msra.mxu0 %v64
    %1187 = vmatmul.f32.gmra.mxu0 %v1117
    %v1188 = vpop.f32.mrf.mxu0
    %v1189 = vadd.f32 %v1169, %v1188
    %1190 = vdwg.mxu0
    %1191 = vmatpush.xpose.msra.mxu0 %v185
    %1192 = vmatpush.xpose.msra.mxu0 %v177
    %1193 = vmatpush.xpose.msra.mxu0 %v169
    %1194 = vmatpush.xpose.msra.mxu0 %v161
    %1195 = vmatpush.xpose.msra.mxu0 %v153
    %1196 = vmatpush.xpose.msra.mxu0 %v145
    %1197 = vmatpush.xpose.msra.mxu0 %v137
    %1198 = vmatpush.xpose.msra.mxu0 %v129
    %1199 = vmatpush.xpose.msra.mxu0 %v121
    %1200 = vmatpush.xpose.msra.mxu0 %v113
    %1201 = vmatpush.xpose.msra.mxu0 %v105
    %1202 = vmatpush.xpose.msra.mxu0 %v97
    %1203 = vmatpush.xpose.msra.mxu0 %v89
    %1204 = vmatpush.xpose.msra.mxu0 %v81
    %1205 = vmatpush.xpose.msra.mxu0 %v73
    %1206 = vmatpush.xpose.msra.mxu0 %v65
    %1207 = vmatmul.f32.gmra.mxu0 %v1118
    %v1208 = vpop.f32.mrf.mxu0
    %v1209 = vadd.f32 %v1189, %v1208
    %1210 = vdwg.mxu0
    %1211 = vmatpush.xpose.msra.mxu0 %v186
    %1212 = vmatpush.xpose.msra.mxu0 %v178
    %1213 = vmatpush.xpose.msra.mxu0 %v170
    %1214 = vmatpush.xpose.msra.mxu0 %v162
    %1215 = vmatpush.xpose.msra.mxu0 %v154
    %1216 = vmatpush.xpose.msra.mxu0 %v146
    %1217 = vmatpush.xpose.msra.mxu0 %v138
    %1218 = vmatpush.xpose.msra.mxu0 %v130
    %1219 = vmatpush.xpose.msra.mxu0 %v122
    %1220 = vmatpush.xpose.msra.mxu0 %v114
    %1221 = vmatpush.xpose.msra.mxu0 %v106
    %1222 = vmatpush.xpose.msra.mxu0 %v98
    %1223 = vmatpush.xpose.msra.mxu0 %v90
    %1224 = vmatpush.xpose.msra.mxu0 %v82
    %1225 = vmatpush.xpose.msra.mxu0 %v74
    %1226 = vmatpush.xpose.msra.mxu0 %v66
    %1227 = vmatmul.f32.gmra.mxu0 %v1119
    %v1228 = vpop.f32.mrf.mxu0
    %v1229 = vadd.f32 %v1209, %v1228
    %1230 = vdwg.mxu0
    %1231 = vmatpush.xpose.msra.mxu0 %v187
    %1232 = vmatpush.xpose.msra.mxu0 %v179
    %1233 = vmatpush.xpose.msra.mxu0 %v171
    %1234 = vmatpush.xpose.msra.mxu0 %v163
    %1235 = vmatpush.xpose.msra.mxu0 %v155
    %1236 = vmatpush.xpose.msra.mxu0 %v147
    %1237 = vmatpush.xpose.msra.mxu0 %v139
    %1238 = vmatpush.xpose.msra.mxu0 %v131
    %1239 = vmatpush.xpose.msra.mxu0 %v123
    %1240 = vmatpush.xpose.msra.mxu0 %v115
    %1241 = vmatpush.xpose.msra.mxu0 %v107
    %1242 = vmatpush.xpose.msra.mxu0 %v99
    %1243 = vmatpush.xpose.msra.mxu0 %v91
    %1244 = vmatpush.xpose.msra.mxu0 %v83
    %1245 = vmatpush.xpose.msra.mxu0 %v75
    %1246 = vmatpush.xpose.msra.mxu0 %v67
    %1247 = vmatmul.f32.gmra.mxu0 %v1120
    %v1248 = vpop.f32.mrf.mxu0
    %v1249 = vadd.f32 %v1229, %v1248
    %1250 = vdwg.mxu0
    %1251 = vmatpush.xpose.msra.mxu0 %v188
    %1252 = vmatpush.xpose.msra.mxu0 %v180
    %1253 = vmatpush.xpose.msra.mxu0 %v172
    %1254 = vmatpush.xpose.msra.mxu0 %v164
    %1255 = vmatpush.xpose.msra.mxu0 %v156
    %1256 = vmatpush.xpose.msra.mxu0 %v148
    %1257 = vmatpush.xpose.msra.mxu0 %v140
    %1258 = vmatpush.xpose.msra.mxu0 %v132
    %1259 = vmatpush.xpose.msra.mxu0 %v124
    %1260 = vmatpush.xpose.msra.mxu0 %v116
    %1261 = vmatpush.xpose.msra.mxu0 %v108
    %1262 = vmatpush.xpose.msra.mxu0 %v100
    %1263 = vmatpush.xpose.msra.mxu0 %v92
    %1264 = vmatpush.xpose.msra.mxu0 %v84
    %1265 = vmatpush.xpose.msra.mxu0 %v76
    %1266 = vmatpush.xpose.msra.mxu0 %v68
    %1267 = vmatmul.f32.gmra.mxu0 %v1121
    %v1268 = vpop.f32.mrf.mxu0
    %v1269 = vadd.f32 %v1249, %v1268
    %1270 = vdwg.mxu0
    %1271 = vmatpush.xpose.msra.mxu0 %v189
    %1272 = vmatpush.xpose.msra.mxu0 %v181
    %1273 = vmatpush.xpose.msra.mxu0 %v173
    %1274 = vmatpush.xpose.msra.mxu0 %v165
    %1275 = vmatpush.xpose.msra.mxu0 %v157
    %1276 = vmatpush.xpose.msra.mxu0 %v149
    %1277 = vmatpush.xpose.msra.mxu0 %v141
    %1278 = vmatpush.xpose.msra.mxu0 %v133
    %1279 = vmatpush.xpose.msra.mxu0 %v125
    %1280 = vmatpush.xpose.msra.mxu0 %v117
    %1281 = vmatpush.xpose.msra.mxu0 %v109
    %1282 = vmatpush.xpose.msra.mxu0 %v101
    %1283 = vmatpush.xpose.msra.mxu0 %v93
    %1284 = vmatpush.xpose.msra.mxu0 %v85
    %1285 = vmatpush.xpose.msra.mxu0 %v77
    %1286 = vmatpush.xpose.msra.mxu0 %v69
    %1287 = vmatmul.f32.gmra.mxu0 %v1122
    %v1288 = vpop.f32.mrf.mxu0
    %v1289 = vadd.f32 %v1269, %v1288
    %1290 = vdwg.mxu0
    %1291 = vmatpush.xpose.msra.mxu0 %v310
    %1292 = vmatpush.xpose.msra.mxu0 %v302
    %1293 = vmatpush.xpose.msra.mxu0 %v294
    %1294 = vmatpush.xpose.msra.mxu0 %v286
    %1295 = vmatpush.xpose.msra.mxu0 %v278
    %1296 = vmatpush.xpose.msra.mxu0 %v270
    %1297 = vmatpush.xpose.msra.mxu0 %v262
    %1298 = vmatpush.xpose.msra.mxu0 %v254
    %1299 = vmatpush.xpose.msra.mxu0 %v246
    %1300 = vmatpush.xpose.msra.mxu0 %v238
    %1301 = vmatpush.xpose.msra.mxu0 %v230
    %1302 = vmatpush.xpose.msra.mxu0 %v222
    %1303 = vmatpush.xpose.msra.mxu0 %v214
    %1304 = vmatpush.xpose.msra.mxu0 %v206
    %1305 = vmatpush.xpose.msra.mxu0 %v198
    %1306 = vmatpush.xpose.msra.mxu0 %v190
    %1307 = vmatmul.f32.gmra.mxu0 %v1115
    %v1308 = vpop.f32.mrf.mxu0
    %v1309 = vadd.f32 %v1089, %v1308
    %1310 = vdwg.mxu0
    %1311 = vmatpush.xpose.msra.mxu0 %v311
    %1312 = vmatpush.xpose.msra.mxu0 %v303
    %1313 = vmatpush.xpose.msra.mxu0 %v295
    %1314 = vmatpush.xpose.msra.mxu0 %v287
    %1315 = vmatpush.xpose.msra.mxu0 %v279
    %1316 = vmatpush.xpose.msra.mxu0 %v271
    %1317 = vmatpush.xpose.msra.mxu0 %v263
    %1318 = vmatpush.xpose.msra.mxu0 %v255
    %1319 = vmatpush.xpose.msra.mxu0 %v247
    %1320 = vmatpush.xpose.msra.mxu0 %v239
    %1321 = vmatpush.xpose.msra.mxu0 %v231
    %1322 = vmatpush.xpose.msra.mxu0 %v223
    %1323 = vmatpush.xpose.msra.mxu0 %v215
    %1324 = vmatpush.xpose.msra.mxu0 %v207
    %1325 = vmatpush.xpose.msra.mxu0 %v199
    %1326 = vmatpush.xpose.msra.mxu0 %v191
    %1327 = vmatmul.f32.gmra.mxu0 %v1116
    %v1328 = vpop.f32.mrf.mxu0
    %v1329 = vadd.f32 %v1309, %v1328
    %1330 = vdwg.mxu0
    %1331 = vmatpush.xpose.msra.mxu0 %v312
    %1332 = vmatpush.xpose.msra.mxu0 %v304
    %1333 = vmatpush.xpose.msra.mxu0 %v296
    %1334 = vmatpush.xpose.msra.mxu0 %v288
    %1335 = vmatpush.xpose.msra.mxu0 %v280
    %1336 = vmatpush.xpose.msra.mxu0 %v272
    %1337 = vmatpush.xpose.msra.mxu0 %v264
    %1338 = vmatpush.xpose.msra.mxu0 %v256
    %1339 = vmatpush.xpose.msra.mxu0 %v248
    %1340 = vmatpush.xpose.msra.mxu0 %v240
    %1341 = vmatpush.xpose.msra.mxu0 %v232
    %1342 = vmatpush.xpose.msra.mxu0 %v224
    %1343 = vmatpush.xpose.msra.mxu0 %v216
    %1344 = vmatpush.xpose.msra.mxu0 %v208
    %1345 = vmatpush.xpose.msra.mxu0 %v200
    %1346 = vmatpush.xpose.msra.mxu0 %v192
    %1347 = vmatmul.f32.gmra.mxu0 %v1117
    %v1348 = vpop.f32.mrf.mxu0
    %v1349 = vadd.f32 %v1329, %v1348
    %1350 = vdwg.mxu0
    %1351 = vmatpush.xpose.msra.mxu0 %v313
    %1352 = vmatpush.xpose.msra.mxu0 %v305
    %1353 = vmatpush.xpose.msra.mxu0 %v297
    %1354 = vmatpush.xpose.msra.mxu0 %v289
    %1355 = vmatpush.xpose.msra.mxu0 %v281
    %1356 = vmatpush.xpose.msra.mxu0 %v273
    %1357 = vmatpush.xpose.msra.mxu0 %v265
    %1358 = vmatpush.xpose.msra.mxu0 %v257
    %1359 = vmatpush.xpose.msra.mxu0 %v249
    %1360 = vmatpush.xpose.msra.mxu0 %v241
    %1361 = vmatpush.xpose.msra.mxu0 %v233
    %1362 = vmatpush.xpose.msra.mxu0 %v225
    %1363 = vmatpush.xpose.msra.mxu0 %v217
    %1364 = vmatpush.xpose.msra.mxu0 %v209
    %1365 = vmatpush.xpose.msra.mxu0 %v201
    %1366 = vmatpush.xpose.msra.mxu0 %v193
    %1367 = vmatmul.f32.gmra.mxu0 %v1118
    %v1368 = vpop.f32.mrf.mxu0
    %v1369 = vadd.f32 %v1349, %v1368
    %1370 = vdwg.mxu0
    %1371 = vmatpush.xpose.msra.mxu0 %v314
    %1372 = vmatpush.xpose.msra.mxu0 %v306
    %1373 = vmatpush.xpose.msra.mxu0 %v298
    %1374 = vmatpush.xpose.msra.mxu0 %v290
    %1375 = vmatpush.xpose.msra.mxu0 %v282
    %1376 = vmatpush.xpose.msra.mxu0 %v274
    %1377 = vmatpush.xpose.msra.mxu0 %v266
    %1378 = vmatpush.xpose.msra.mxu0 %v258
    %1379 = vmatpush.xpose.msra.mxu0 %v250
    %1380 = vmatpush.xpose.msra.mxu0 %v242
    %1381 = vmatpush.xpose.msra.mxu0 %v234
    %1382 = vmatpush.xpose.msra.mxu0 %v226
    %1383 = vmatpush.xpose.msra.mxu0 %v218
    %1384 = vmatpush.xpose.msra.mxu0 %v210
    %1385 = vmatpush.xpose.msra.mxu0 %v202
    %1386 = vmatpush.xpose.msra.mxu0 %v194
    %1387 = vmatmul.f32.gmra.mxu0 %v1119
    %v1388 = vpop.f32.mrf.mxu0
    %v1389 = vadd.f32 %v1369, %v1388
    %1390 = vdwg.mxu0
    %1391 = vmatpush.xpose.msra.mxu0 %v315
    %1392 = vmatpush.xpose.msra.mxu0 %v307
    %1393 = vmatpush.xpose.msra.mxu0 %v299
    %1394 = vmatpush.xpose.msra.mxu0 %v291
    %1395 = vmatpush.xpose.msra.mxu0 %v283
    %1396 = vmatpush.xpose.msra.mxu0 %v275
    %1397 = vmatpush.xpose.msra.mxu0 %v267
    %1398 = vmatpush.xpose.msra.mxu0 %v259
    %1399 = vmatpush.xpose.msra.mxu0 %v251
    %1400 = vmatpush.xpose.msra.mxu0 %v243
    %1401 = vmatpush.xpose.msra.mxu0 %v235
    %1402 = vmatpush.xpose.msra.mxu0 %v227
    %1403 = vmatpush.xpose.msra.mxu0 %v219
    %1404 = vmatpush.xpose.msra.mxu0 %v211
    %1405 = vmatpush.xpose.msra.mxu0 %v203
    %1406 = vmatpush.xpose.msra.mxu0 %v195
    %1407 = vmatmul.f32.gmra.mxu0 %v1120
    %v1408 = vpop.f32.mrf.mxu0
    %v1409 = vadd.f32 %v1389, %v1408
    %1410 = vdwg.mxu0
    %1411 = vmatpush.xpose.msra.mxu0 %v316
    %1412 = vmatpush.xpose.msra.mxu0 %v308
    %1413 = vmatpush.xpose.msra.mxu0 %v300
    %1414 = vmatpush.xpose.msra.mxu0 %v292
    %1415 = vmatpush.xpose.msra.mxu0 %v284
    %1416 = vmatpush.xpose.msra.mxu0 %v276
    %1417 = vmatpush.xpose.msra.mxu0 %v268
    %1418 = vmatpush.xpose.msra.mxu0 %v260
    %1419 = vmatpush.xpose.msra.mxu0 %v252
    %1420 = vmatpush.xpose.msra.mxu0 %v244
    %1421 = vmatpush.xpose.msra.mxu0 %v236
    %1422 = vmatpush.xpose.msra.mxu0 %v228
    %1423 = vmatpush.xpose.msra.mxu0 %v220
    %1424 = vmatpush.xpose.msra.mxu0 %v212
    %1425 = vmatpush.xpose.msra.mxu0 %v204
    %1426 = vmatpush.xpose.msra.mxu0 %v196
    %1427 = vmatmul.f32.gmra.mxu0 %v1121
    %v1428 = vpop.f32.mrf.mxu0
    %v1429 = vadd.f32 %v1409, %v1428
    %1430 = vdwg.mxu0
    %1431 = vmatpush.xpose.msra.mxu0 %v317
    %1432 = vmatpush.xpose.msra.mxu0 %v309
    %1433 = vmatpush.xpose.msra.mxu0 %v301
    %1434 = vmatpush.xpose.msra.mxu0 %v293
    %1435 = vmatpush.xpose.msra.mxu0 %v285
    %1436 = vmatpush.xpose.msra.mxu0 %v277
    %1437 = vmatpush.xpose.msra.mxu0 %v269
    %1438 = vmatpush.xpose.msra.mxu0 %v261
    %1439 = vmatpush.xpose.msra.mxu0 %v253
    %1440 = vmatpush.xpose.msra.mxu0 %v245
    %1441 = vmatpush.xpose.msra.mxu0 %v237
    %1442 = vmatpush.xpose.msra.mxu0 %v229
    %1443 = vmatpush.xpose.msra.mxu0 %v221
    %1444 = vmatpush.xpose.msra.mxu0 %v213
    %1445 = vmatpush.xpose.msra.mxu0 %v205
    %1446 = vmatpush.xpose.msra.mxu0 %v197
    %1447 = vmatmul.f32.gmra.mxu0 %v1122
    %v1448 = vpop.f32.mrf.mxu0
    %v1449 = vadd.f32 %v1429, %v1448
    %1450 = vdwg.mxu0
    %1451 = vmatpush.xpose.msra.mxu0 %v438
    %1452 = vmatpush.xpose.msra.mxu0 %v430
    %1453 = vmatpush.xpose.msra.mxu0 %v422
    %1454 = vmatpush.xpose.msra.mxu0 %v414
    %1455 = vmatpush.xpose.msra.mxu0 %v406
    %1456 = vmatpush.xpose.msra.mxu0 %v398
    %1457 = vmatpush.xpose.msra.mxu0 %v390
    %1458 = vmatpush.xpose.msra.mxu0 %v382
    %1459 = vmatpush.xpose.msra.mxu0 %v374
    %1460 = vmatpush.xpose.msra.mxu0 %v366
    %1461 = vmatpush.xpose.msra.mxu0 %v358
    %1462 = vmatpush.xpose.msra.mxu0 %v350
    %1463 = vmatpush.xpose.msra.mxu0 %v342
    %1464 = vmatpush.xpose.msra.mxu0 %v334
    %1465 = vmatpush.xpose.msra.mxu0 %v326
    %1466 = vmatpush.xpose.msra.mxu0 %v318
    %1467 = vmatmul.f32.gmra.mxu0 %v1115
    %v1468 = vpop.f32.mrf.mxu0
    %v1469 = vadd.f32 %v1090, %v1468
    %1470 = vdwg.mxu0
    %1471 = vmatpush.xpose.msra.mxu0 %v439
    %1472 = vmatpush.xpose.msra.mxu0 %v431
    %1473 = vmatpush.xpose.msra.mxu0 %v423
    %1474 = vmatpush.xpose.msra.mxu0 %v415
    %1475 = vmatpush.xpose.msra.mxu0 %v407
    %1476 = vmatpush.xpose.msra.mxu0 %v399
    %1477 = vmatpush.xpose.msra.mxu0 %v391
    %1478 = vmatpush.xpose.msra.mxu0 %v383
    %1479 = vmatpush.xpose.msra.mxu0 %v375
    %1480 = vmatpush.xpose.msra.mxu0 %v367
    %1481 = vmatpush.xpose.msra.mxu0 %v359
    %1482 = vmatpush.xpose.msra.mxu0 %v351
    %1483 = vmatpush.xpose.msra.mxu0 %v343
    %1484 = vmatpush.xpose.msra.mxu0 %v335
    %1485 = vmatpush.xpose.msra.mxu0 %v327
    %1486 = vmatpush.xpose.msra.mxu0 %v319
    %1487 = vmatmul.f32.gmra.mxu0 %v1116
    %v1488 = vpop.f32.mrf.mxu0
    %v1489 = vadd.f32 %v1469, %v1488
    %1490 = vdwg.mxu0
    %1491 = vmatpush.xpose.msra.mxu0 %v440
    %1492 = vmatpush.xpose.msra.mxu0 %v432
    %1493 = vmatpush.xpose.msra.mxu0 %v424
    %1494 = vmatpush.xpose.msra.mxu0 %v416
    %1495 = vmatpush.xpose.msra.mxu0 %v408
    %1496 = vmatpush.xpose.msra.mxu0 %v400
    %1497 = vmatpush.xpose.msra.mxu0 %v392
    %1498 = vmatpush.xpose.msra.mxu0 %v384
    %1499 = vmatpush.xpose.msra.mxu0 %v376
    %1500 = vmatpush.xpose.msra.mxu0 %v368
    %1501 = vmatpush.xpose.msra.mxu0 %v360
    %1502 = vmatpush.xpose.msra.mxu0 %v352
    %1503 = vmatpush.xpose.msra.mxu0 %v344
    %1504 = vmatpush.xpose.msra.mxu0 %v336
    %1505 = vmatpush.xpose.msra.mxu0 %v328
    %1506 = vmatpush.xpose.msra.mxu0 %v320
    %1507 = vmatmul.f32.gmra.mxu0 %v1117
    %v1508 = vpop.f32.mrf.mxu0
    %v1509 = vadd.f32 %v1489, %v1508
    %1510 = vdwg.mxu0
    %1511 = vmatpush.xpose.msra.mxu0 %v441
    %1512 = vmatpush.xpose.msra.mxu0 %v433
    %1513 = vmatpush.xpose.msra.mxu0 %v425
    %1514 = vmatpush.xpose.msra.mxu0 %v417
    %1515 = vmatpush.xpose.msra.mxu0 %v409
    %1516 = vmatpush.xpose.msra.mxu0 %v401
    %1517 = vmatpush.xpose.msra.mxu0 %v393
    %1518 = vmatpush.xpose.msra.mxu0 %v385
    %1519 = vmatpush.xpose.msra.mxu0 %v377
    %1520 = vmatpush.xpose.msra.mxu0 %v369
    %1521 = vmatpush.xpose.msra.mxu0 %v361
    %1522 = vmatpush.xpose.msra.mxu0 %v353
    %1523 = vmatpush.xpose.msra.mxu0 %v345
    %1524 = vmatpush.xpose.msra.mxu0 %v337
    %1525 = vmatpush.xpose.msra.mxu0 %v329
    %1526 = vmatpush.xpose.msra.mxu0 %v321
    %1527 = vmatmul.f32.gmra.mxu0 %v1118
    %v1528 = vpop.f32.mrf.mxu0
    %v1529 = vadd.f32 %v1509, %v1528
    %1530 = vdwg.mxu0
    %1531 = vmatpush.xpose.msra.mxu0 %v442
    %1532 = vmatpush.xpose.msra.mxu0 %v434
    %1533 = vmatpush.xpose.msra.mxu0 %v426
    %1534 = vmatpush.xpose.msra.mxu0 %v418
    %1535 = vmatpush.xpose.msra.mxu0 %v410
    %1536 = vmatpush.xpose.msra.mxu0 %v402
    %1537 = vmatpush.xpose.msra.mxu0 %v394
    %1538 = vmatpush.xpose.msra.mxu0 %v386
    %1539 = vmatpush.xpose.msra.mxu0 %v378
    %1540 = vmatpush.xpose.msra.mxu0 %v370
    %1541 = vmatpush.xpose.msra.mxu0 %v362
    %1542 = vmatpush.xpose.msra.mxu0 %v354
    %1543 = vmatpush.xpose.msra.mxu0 %v346
    %1544 = vmatpush.xpose.msra.mxu0 %v338
    %1545 = vmatpush.xpose.msra.mxu0 %v330
    %1546 = vmatpush.xpose.msra.mxu0 %v322
    %1547 = vmatmul.f32.gmra.mxu0 %v1119
    %v1548 = vpop.f32.mrf.mxu0
    %v1549 = vadd.f32 %v1529, %v1548
    %1550 = vdwg.mxu0
    %1551 = vmatpush.xpose.msra.mxu0 %v443
    %1552 = vmatpush.xpose.msra.mxu0 %v435
    %1553 = vmatpush.xpose.msra.mxu0 %v427
    %1554 = vmatpush.xpose.msra.mxu0 %v419
    %1555 = vmatpush.xpose.msra.mxu0 %v411
    %1556 = vmatpush.xpose.msra.mxu0 %v403
    %1557 = vmatpush.xpose.msra.mxu0 %v395
    %1558 = vmatpush.xpose.msra.mxu0 %v387
    %1559 = vmatpush.xpose.msra.mxu0 %v379
    %1560 = vmatpush.xpose.msra.mxu0 %v371
    %1561 = vmatpush.xpose.msra.mxu0 %v363
    %1562 = vmatpush.xpose.msra.mxu0 %v355
    %1563 = vmatpush.xpose.msra.mxu0 %v347
    %1564 = vmatpush.xpose.msra.mxu0 %v339
    %1565 = vmatpush.xpose.msra.mxu0 %v331
    %1566 = vmatpush.xpose.msra.mxu0 %v323
    %1567 = vmatmul.f32.gmra.mxu0 %v1120
    %v1568 = vpop.f32.mrf.mxu0
    %v1569 = vadd.f32 %v1549, %v1568
    %1570 = vdwg.mxu0
    %1571 = vmatpush.xpose.msra.mxu0 %v444
    %1572 = vmatpush.xpose.msra.mxu0 %v436
    %1573 = vmatpush.xpose.msra.mxu0 %v428
    %1574 = vmatpush.xpose.msra.mxu0 %v420
    %1575 = vmatpush.xpose.msra.mxu0 %v412
    %1576 = vmatpush.xpose.msra.mxu0 %v404
    %1577 = vmatpush.xpose.msra.mxu0 %v396
    %1578 = vmatpush.xpose.msra.mxu0 %v388
    %1579 = vmatpush.xpose.msra.mxu0 %v380
    %1580 = vmatpush.xpose.msra.mxu0 %v372
    %1581 = vmatpush.xpose.msra.mxu0 %v364
    %1582 = vmatpush.xpose.msra.mxu0 %v356
    %1583 = vmatpush.xpose.msra.mxu0 %v348
    %1584 = vmatpush.xpose.msra.mxu0 %v340
    %1585 = vmatpush.xpose.msra.mxu0 %v332
    %1586 = vmatpush.xpose.msra.mxu0 %v324
    %1587 = vmatmul.f32.gmra.mxu0 %v1121
    %v1588 = vpop.f32.mrf.mxu0
    %v1589 = vadd.f32 %v1569, %v1588
    %1590 = vdwg.mxu0
    %1591 = vmatpush.xpose.msra.mxu0 %v445
    %1592 = vmatpush.xpose.msra.mxu0 %v437
    %1593 = vmatpush.xpose.msra.mxu0 %v429
    %1594 = vmatpush.xpose.msra.mxu0 %v421
    %1595 = vmatpush.xpose.msra.mxu0 %v413
    %1596 = vmatpush.xpose.msra.mxu0 %v405
    %1597 = vmatpush.xpose.msra.mxu0 %v397
    %1598 = vmatpush.xpose.msra.mxu0 %v389
    %1599 = vmatpush.xpose.msra.mxu0 %v381
    %1600 = vmatpush.xpose.msra.mxu0 %v373
    %1601 = vmatpush.xpose.msra.mxu0 %v365
    %1602 = vmatpush.xpose.msra.mxu0 %v357
    %1603 = vmatpush.xpose.msra.mxu0 %v349
    %1604 = vmatpush.xpose.msra.mxu0 %v341
    %1605 = vmatpush.xpose.msra.mxu0 %v333
    %1606 = vmatpush.xpose.msra.mxu0 %v325
    %1607 = vmatmul.f32.gmra.mxu0 %v1122
    %v1608 = vpop.f32.mrf.mxu0
    %v1609 = vadd.f32 %v1589, %v1608
    %1610 = vdwg.mxu0
    %1611 = vmatpush.xpose.msra.mxu0 %v566
    %1612 = vmatpush.xpose.msra.mxu0 %v558
    %1613 = vmatpush.xpose.msra.mxu0 %v550
    %1614 = vmatpush.xpose.msra.mxu0 %v542
    %1615 = vmatpush.xpose.msra.mxu0 %v534
    %1616 = vmatpush.xpose.msra.mxu0 %v526
    %1617 = vmatpush.xpose.msra.mxu0 %v518
    %1618 = vmatpush.xpose.msra.mxu0 %v510
    %1619 = vmatpush.xpose.msra.mxu0 %v502
    %1620 = vmatpush.xpose.msra.mxu0 %v494
    %1621 = vmatpush.xpose.msra.mxu0 %v486
    %1622 = vmatpush.xpose.msra.mxu0 %v478
    %1623 = vmatpush.xpose.msra.mxu0 %v470
    %1624 = vmatpush.xpose.msra.mxu0 %v462
    %1625 = vmatpush.xpose.msra.mxu0 %v454
    %1626 = vmatpush.xpose.msra.mxu0 %v446
    %1627 = vmatmul.f32.gmra.mxu0 %v1115
    %v1628 = vpop.f32.mrf.mxu0
    %v1629 = vadd.f32 %v1091, %v1628
    %1630 = vdwg.mxu0
    %1631 = vmatpush.xpose.msra.mxu0 %v567
    %1632 = vmatpush.xpose.msra.mxu0 %v559
    %1633 = vmatpush.xpose.msra.mxu0 %v551
    %1634 = vmatpush.xpose.msra.mxu0 %v543
    %1635 = vmatpush.xpose.msra.mxu0 %v535
    %1636 = vmatpush.xpose.msra.mxu0 %v527
    %1637 = vmatpush.xpose.msra.mxu0 %v519
    %1638 = vmatpush.xpose.msra.mxu0 %v511
    %1639 = vmatpush.xpose.msra.mxu0 %v503
    %1640 = vmatpush.xpose.msra.mxu0 %v495
    %1641 = vmatpush.xpose.msra.mxu0 %v487
    %1642 = vmatpush.xpose.msra.mxu0 %v479
    %1643 = vmatpush.xpose.msra.mxu0 %v471
    %1644 = vmatpush.xpose.msra.mxu0 %v463
    %1645 = vmatpush.xpose.msra.mxu0 %v455
    %1646 = vmatpush.xpose.msra.mxu0 %v447
    %1647 = vmatmul.f32.gmra.mxu0 %v1116
    %v1648 = vpop.f32.mrf.mxu0
    %v1649 = vadd.f32 %v1629, %v1648
    %1650 = vdwg.mxu0
    %1651 = vmatpush.xpose.msra.mxu0 %v568
    %1652 = vmatpush.xpose.msra.mxu0 %v560
    %1653 = vmatpush.xpose.msra.mxu0 %v552
    %1654 = vmatpush.xpose.msra.mxu0 %v544
    %1655 = vmatpush.xpose.msra.mxu0 %v536
    %1656 = vmatpush.xpose.msra.mxu0 %v528
    %1657 = vmatpush.xpose.msra.mxu0 %v520
    %1658 = vmatpush.xpose.msra.mxu0 %v512
    %1659 = vmatpush.xpose.msra.mxu0 %v504
    %1660 = vmatpush.xpose.msra.mxu0 %v496
    %1661 = vmatpush.xpose.msra.mxu0 %v488
    %1662 = vmatpush.xpose.msra.mxu0 %v480
    %1663 = vmatpush.xpose.msra.mxu0 %v472
    %1664 = vmatpush.xpose.msra.mxu0 %v464
    %1665 = vmatpush.xpose.msra.mxu0 %v456
    %1666 = vmatpush.xpose.msra.mxu0 %v448
    %1667 = vmatmul.f32.gmra.mxu0 %v1117
    %v1668 = vpop.f32.mrf.mxu0
    %v1669 = vadd.f32 %v1649, %v1668
    %1670 = vdwg.mxu0
    %1671 = vmatpush.xpose.msra.mxu0 %v569
    %1672 = vmatpush.xpose.msra.mxu0 %v561
    %1673 = vmatpush.xpose.msra.mxu0 %v553
    %1674 = vmatpush.xpose.msra.mxu0 %v545
    %1675 = vmatpush.xpose.msra.mxu0 %v537
    %1676 = vmatpush.xpose.msra.mxu0 %v529
    %1677 = vmatpush.xpose.msra.mxu0 %v521
    %1678 = vmatpush.xpose.msra.mxu0 %v513
    %1679 = vmatpush.xpose.msra.mxu0 %v505
    %1680 = vmatpush.xpose.msra.mxu0 %v497
    %1681 = vmatpush.xpose.msra.mxu0 %v489
    %1682 = vmatpush.xpose.msra.mxu0 %v481
    %1683 = vmatpush.xpose.msra.mxu0 %v473
    %1684 = vmatpush.xpose.msra.mxu0 %v465
    %1685 = vmatpush.xpose.msra.mxu0 %v457
    %1686 = vmatpush.xpose.msra.mxu0 %v449
    %1687 = vmatmul.f32.gmra.mxu0 %v1118
    %v1688 = vpop.f32.mrf.mxu0
    %v1689 = vadd.f32 %v1669, %v1688
    %1690 = vdwg.mxu0
    %1691 = vmatpush.xpose.msra.mxu0 %v570
    %1692 = vmatpush.xpose.msra.mxu0 %v562
    %1693 = vmatpush.xpose.msra.mxu0 %v554
    %1694 = vmatpush.xpose.msra.mxu0 %v546
    %1695 = vmatpush.xpose.msra.mxu0 %v538
    %1696 = vmatpush.xpose.msra.mxu0 %v530
    %1697 = vmatpush.xpose.msra.mxu0 %v522
    %1698 = vmatpush.xpose.msra.mxu0 %v514
    %1699 = vmatpush.xpose.msra.mxu0 %v506
    %1700 = vmatpush.xpose.msra.mxu0 %v498
    %1701 = vmatpush.xpose.msra.mxu0 %v490
    %1702 = vmatpush.xpose.msra.mxu0 %v482
    %1703 = vmatpush.xpose.msra.mxu0 %v474
    %1704 = vmatpush.xpose.msra.mxu0 %v466
    %1705 = vmatpush.xpose.msra.mxu0 %v458
    %1706 = vmatpush.xpose.msra.mxu0 %v450
    %1707 = vmatmul.f32.gmra.mxu0 %v1119
    %v1708 = vpop.f32.mrf.mxu0
    %v1709 = vadd.f32 %v1689, %v1708
    %1710 = vdwg.mxu0
    %1711 = vmatpush.xpose.msra.mxu0 %v571
    %1712 = vmatpush.xpose.msra.mxu0 %v563
    %1713 = vmatpush.xpose.msra.mxu0 %v555
    %1714 = vmatpush.xpose.msra.mxu0 %v547
    %1715 = vmatpush.xpose.msra.mxu0 %v539
    %1716 = vmatpush.xpose.msra.mxu0 %v531
    %1717 = vmatpush.xpose.msra.mxu0 %v523
    %1718 = vmatpush.xpose.msra.mxu0 %v515
    %1719 = vmatpush.xpose.msra.mxu0 %v507
    %1720 = vmatpush.xpose.msra.mxu0 %v499
    %1721 = vmatpush.xpose.msra.mxu0 %v491
    %1722 = vmatpush.xpose.msra.mxu0 %v483
    %1723 = vmatpush.xpose.msra.mxu0 %v475
    %1724 = vmatpush.xpose.msra.mxu0 %v467
    %1725 = vmatpush.xpose.msra.mxu0 %v459
    %1726 = vmatpush.xpose.msra.mxu0 %v451
    %1727 = vmatmul.f32.gmra.mxu0 %v1120
    %v1728 = vpop.f32.mrf.mxu0
    %v1729 = vadd.f32 %v1709, %v1728
    %1730 = vdwg.mxu0
    %1731 = vmatpush.xpose.msra.mxu0 %v572
    %1732 = vmatpush.xpose.msra.mxu0 %v564
    %1733 = vmatpush.xpose.msra.mxu0 %v556
    %1734 = vmatpush.xpose.msra.mxu0 %v548
    %1735 = vmatpush.xpose.msra.mxu0 %v540
    %1736 = vmatpush.xpose.msra.mxu0 %v532
    %1737 = vmatpush.xpose.msra.mxu0 %v524
    %1738 = vmatpush.xpose.msra.mxu0 %v516
    %1739 = vmatpush.xpose.msra.mxu0 %v508
    %1740 = vmatpush.xpose.msra.mxu0 %v500
    %1741 = vmatpush.xpose.msra.mxu0 %v492
    %1742 = vmatpush.xpose.msra.mxu0 %v484
    %1743 = vmatpush.xpose.msra.mxu0 %v476
    %1744 = vmatpush.xpose.msra.mxu0 %v468
    %1745 = vmatpush.xpose.msra.mxu0 %v460
    %1746 = vmatpush.xpose.msra.mxu0 %v452
    %1747 = vmatmul.f32.gmra.mxu0 %v1121
    %v1748 = vpop.f32.mrf.mxu0
    %v1749 = vadd.f32 %v1729, %v1748
    %1750 = vdwg.mxu0
    %1751 = vmatpush.xpose.msra.mxu0 %v573
    %1752 = vmatpush.xpose.msra.mxu0 %v565
    %1753 = vmatpush.xpose.msra.mxu0 %v557
    %1754 = vmatpush.xpose.msra.mxu0 %v549
    %1755 = vmatpush.xpose.msra.mxu0 %v541
    %1756 = vmatpush.xpose.msra.mxu0 %v533
    %1757 = vmatpush.xpose.msra.mxu0 %v525
    %1758 = vmatpush.xpose.msra.mxu0 %v517
    %1759 = vmatpush.xpose.msra.mxu0 %v509
    %1760 = vmatpush.xpose.msra.mxu0 %v501
    %1761 = vmatpush.xpose.msra.mxu0 %v493
    %1762 = vmatpush.xpose.msra.mxu0 %v485
    %1763 = vmatpush.xpose.msra.mxu0 %v477
    %1764 = vmatpush.xpose.msra.mxu0 %v469
    %1765 = vmatpush.xpose.msra.mxu0 %v461
    %1766 = vmatpush.xpose.msra.mxu0 %v453
    %1767 = vmatmul.f32.gmra.mxu0 %v1122
    %v1768 = vpop.f32.mrf.mxu0
    %v1769 = vadd.f32 %v1749, %v1768
    %1770 = vdwg.mxu0
    %1771 = vmatpush.xpose.msra.mxu0 %v694
    %1772 = vmatpush.xpose.msra.mxu0 %v686
    %1773 = vmatpush.xpose.msra.mxu0 %v678
    %1774 = vmatpush.xpose.msra.mxu0 %v670
    %1775 = vmatpush.xpose.msra.mxu0 %v662
    %1776 = vmatpush.xpose.msra.mxu0 %v654
    %1777 = vmatpush.xpose.msra.mxu0 %v646
    %1778 = vmatpush.xpose.msra.mxu0 %v638
    %1779 = vmatpush.xpose.msra.mxu0 %v630
    %1780 = vmatpush.xpose.msra.mxu0 %v622
    %1781 = vmatpush.xpose.msra.mxu0 %v614
    %1782 = vmatpush.xpose.msra.mxu0 %v606
    %1783 = vmatpush.xpose.msra.mxu0 %v598
    %1784 = vmatpush.xpose.msra.mxu0 %v590
    %1785 = vmatpush.xpose.msra.mxu0 %v582
    %1786 = vmatpush.xpose.msra.mxu0 %v574
    %1787 = vmatmul.f32.gmra.mxu0 %v1115
    %v1788 = vpop.f32.mrf.mxu0
    %v1789 = vadd.f32 %v1092, %v1788
    %1790 = vdwg.mxu0
    %1791 = vmatpush.xpose.msra.mxu0 %v695
    %1792 = vmatpush.xpose.msra.mxu0 %v687
    %1793 = vmatpush.xpose.msra.mxu0 %v679
    %1794 = vmatpush.xpose.msra.mxu0 %v671
    %1795 = vmatpush.xpose.msra.mxu0 %v663
    %1796 = vmatpush.xpose.msra.mxu0 %v655
    %1797 = vmatpush.xpose.msra.mxu0 %v647
    %1798 = vmatpush.xpose.msra.mxu0 %v639
    %1799 = vmatpush.xpose.msra.mxu0 %v631
    %1800 = vmatpush.xpose.msra.mxu0 %v623
    %1801 = vmatpush.xpose.msra.mxu0 %v615
    %1802 = vmatpush.xpose.msra.mxu0 %v607
    %1803 = vmatpush.xpose.msra.mxu0 %v599
    %1804 = vmatpush.xpose.msra.mxu0 %v591
    %1805 = vmatpush.xpose.msra.mxu0 %v583
    %1806 = vmatpush.xpose.msra.mxu0 %v575
    %1807 = vmatmul.f32.gmra.mxu0 %v1116
    %v1808 = vpop.f32.mrf.mxu0
    %v1809 = vadd.f32 %v1789, %v1808
    %1810 = vdwg.mxu0
    %1811 = vmatpush.xpose.msra.mxu0 %v696
    %1812 = vmatpush.xpose.msra.mxu0 %v688
    %1813 = vmatpush.xpose.msra.mxu0 %v680
    %1814 = vmatpush.xpose.msra.mxu0 %v672
    %1815 = vmatpush.xpose.msra.mxu0 %v664
    %1816 = vmatpush.xpose.msra.mxu0 %v656
    %1817 = vmatpush.xpose.msra.mxu0 %v648
    %1818 = vmatpush.xpose.msra.mxu0 %v640
    %1819 = vmatpush.xpose.msra.mxu0 %v632
    %1820 = vmatpush.xpose.msra.mxu0 %v624
    %1821 = vmatpush.xpose.msra.mxu0 %v616
    %1822 = vmatpush.xpose.msra.mxu0 %v608
    %1823 = vmatpush.xpose.msra.mxu0 %v600
    %1824 = vmatpush.xpose.msra.mxu0 %v592
    %1825 = vmatpush.xpose.msra.mxu0 %v584
    %1826 = vmatpush.xpose.msra.mxu0 %v576
    %1827 = vmatmul.f32.gmra.mxu0 %v1117
    %v1828 = vpop.f32.mrf.mxu0
    %v1829 = vadd.f32 %v1809, %v1828
    %1830 = vdwg.mxu0
    %1831 = vmatpush.xpose.msra.mxu0 %v697
    %1832 = vmatpush.xpose.msra.mxu0 %v689
    %1833 = vmatpush.xpose.msra.mxu0 %v681
    %1834 = vmatpush.xpose.msra.mxu0 %v673
    %1835 = vmatpush.xpose.msra.mxu0 %v665
    %1836 = vmatpush.xpose.msra.mxu0 %v657
    %1837 = vmatpush.xpose.msra.mxu0 %v649
    %1838 = vmatpush.xpose.msra.mxu0 %v641
    %1839 = vmatpush.xpose.msra.mxu0 %v633
    %1840 = vmatpush.xpose.msra.mxu0 %v625
    %1841 = vmatpush.xpose.msra.mxu0 %v617
    %1842 = vmatpush.xpose.msra.mxu0 %v609
    %1843 = vmatpush.xpose.msra.mxu0 %v601
    %1844 = vmatpush.xpose.msra.mxu0 %v593
    %1845 = vmatpush.xpose.msra.mxu0 %v585
    %1846 = vmatpush.xpose.msra.mxu0 %v577
    %1847 = vmatmul.f32.gmra.mxu0 %v1118
    %v1848 = vpop.f32.mrf.mxu0
    %v1849 = vadd.f32 %v1829, %v1848
    %1850 = vdwg.mxu0
    %1851 = vmatpush.xpose.msra.mxu0 %v698
    %1852 = vmatpush.xpose.msra.mxu0 %v690
    %1853 = vmatpush.xpose.msra.mxu0 %v682
    %1854 = vmatpush.xpose.msra.mxu0 %v674
    %1855 = vmatpush.xpose.msra.mxu0 %v666
    %1856 = vmatpush.xpose.msra.mxu0 %v658
    %1857 = vmatpush.xpose.msra.mxu0 %v650
    %1858 = vmatpush.xpose.msra.mxu0 %v642
    %1859 = vmatpush.xpose.msra.mxu0 %v634
    %1860 = vmatpush.xpose.msra.mxu0 %v626
    %1861 = vmatpush.xpose.msra.mxu0 %v618
    %1862 = vmatpush.xpose.msra.mxu0 %v610
    %1863 = vmatpush.xpose.msra.mxu0 %v602
    %1864 = vmatpush.xpose.msra.mxu0 %v594
    %1865 = vmatpush.xpose.msra.mxu0 %v586
    %1866 = vmatpush.xpose.msra.mxu0 %v578
    %1867 = vmatmul.f32.gmra.mxu0 %v1119
    %v1868 = vpop.f32.mrf.mxu0
    %v1869 = vadd.f32 %v1849, %v1868
    %1870 = vdwg.mxu0
    %1871 = vmatpush.xpose.msra.mxu0 %v699
    %1872 = vmatpush.xpose.msra.mxu0 %v691
    %1873 = vmatpush.xpose.msra.mxu0 %v683
    %1874 = vmatpush.xpose.msra.mxu0 %v675
    %1875 = vmatpush.xpose.msra.mxu0 %v667
    %1876 = vmatpush.xpose.msra.mxu0 %v659
    %1877 = vmatpush.xpose.msra.mxu0 %v651
    %1878 = vmatpush.xpose.msra.mxu0 %v643
    %1879 = vmatpush.xpose.msra.mxu0 %v635
    %1880 = vmatpush.xpose.msra.mxu0 %v627
    %1881 = vmatpush.xpose.msra.mxu0 %v619
    %1882 = vmatpush.xpose.msra.mxu0 %v611
    %1883 = vmatpush.xpose.msra.mxu0 %v603
    %1884 = vmatpush.xpose.msra.mxu0 %v595
    %1885 = vmatpush.xpose.msra.mxu0 %v587
    %1886 = vmatpush.xpose.msra.mxu0 %v579
    %1887 = vmatmul.f32.gmra.mxu0 %v1120
    %v1888 = vpop.f32.mrf.mxu0
    %v1889 = vadd.f32 %v1869, %v1888
    %1890 = vdwg.mxu0
    %1891 = vmatpush.xpose.msra.mxu0 %v700
    %1892 = vmatpush.xpose.msra.mxu0 %v692
    %1893 = vmatpush.xpose.msra.mxu0 %v684
    %1894 = vmatpush.xpose.msra.mxu0 %v676
    %1895 = vmatpush.xpose.msra.mxu0 %v668
    %1896 = vmatpush.xpose.msra.mxu0 %v660
    %1897 = vmatpush.xpose.msra.mxu0 %v652
    %1898 = vmatpush.xpose.msra.mxu0 %v644
    %1899 = vmatpush.xpose.msra.mxu0 %v636
    %1900 = vmatpush.xpose.msra.mxu0 %v628
    %1901 = vmatpush.xpose.msra.mxu0 %v620
    %1902 = vmatpush.xpose.msra.mxu0 %v612
    %1903 = vmatpush.xpose.msra.mxu0 %v604
    %1904 = vmatpush.xpose.msra.mxu0 %v596
    %1905 = vmatpush.xpose.msra.mxu0 %v588
    %1906 = vmatpush.xpose.msra.mxu0 %v580
    %1907 = vmatmul.f32.gmra.mxu0 %v1121
    %v1908 = vpop.f32.mrf.mxu0
    %v1909 = vadd.f32 %v1889, %v1908
    %1910 = vdwg.mxu0
    %1911 = vmatpush.xpose.msra.mxu0 %v701
    %1912 = vmatpush.xpose.msra.mxu0 %v693
    %1913 = vmatpush.xpose.msra.mxu0 %v685
    %1914 = vmatpush.xpose.msra.mxu0 %v677
    %1915 = vmatpush.xpose.msra.mxu0 %v669
    %1916 = vmatpush.xpose.msra.mxu0 %v661
    %1917 = vmatpush.xpose.msra.mxu0 %v653
    %1918 = vmatpush.xpose.msra.mxu0 %v645
    %1919 = vmatpush.xpose.msra.mxu0 %v637
    %1920 = vmatpush.xpose.msra.mxu0 %v629
    %1921 = vmatpush.xpose.msra.mxu0 %v621
    %1922 = vmatpush.xpose.msra.mxu0 %v613
    %1923 = vmatpush.xpose.msra.mxu0 %v605
    %1924 = vmatpush.xpose.msra.mxu0 %v597
    %1925 = vmatpush.xpose.msra.mxu0 %v589
    %1926 = vmatpush.xpose.msra.mxu0 %v581
    %1927 = vmatmul.f32.gmra.mxu0 %v1122
    %v1928 = vpop.f32.mrf.mxu0
    %v1929 = vadd.f32 %v1909, %v1928
    %1930 = vdwg.mxu0
    %1931 = vmatpush.xpose.msra.mxu0 %v822
    %1932 = vmatpush.xpose.msra.mxu0 %v814
    %1933 = vmatpush.xpose.msra.mxu0 %v806
    %1934 = vmatpush.xpose.msra.mxu0 %v798
    %1935 = vmatpush.xpose.msra.mxu0 %v790
    %1936 = vmatpush.xpose.msra.mxu0 %v782
    %1937 = vmatpush.xpose.msra.mxu0 %v774
    %1938 = vmatpush.xpose.msra.mxu0 %v766
    %1939 = vmatpush.xpose.msra.mxu0 %v758
    %1940 = vmatpush.xpose.msra.mxu0 %v750
    %1941 = vmatpush.xpose.msra.mxu0 %v742
    %1942 = vmatpush.xpose.msra.mxu0 %v734
    %1943 = vmatpush.xpose.msra.mxu0 %v726
    %1944 = vmatpush.xpose.msra.mxu0 %v718
    %1945 = vmatpush.xpose.msra.mxu0 %v710
    %1946 = vmatpush.xpose.msra.mxu0 %v702
    %1947 = vmatmul.f32.gmra.mxu0 %v1115
    %v1948 = vpop.f32.mrf.mxu0
    %v1949 = vadd.f32 %v1093, %v1948
    %1950 = vdwg.mxu0
    %1951 = vmatpush.xpose.msra.mxu0 %v823
    %1952 = vmatpush.xpose.msra.mxu0 %v815
    %1953 = vmatpush.xpose.msra.mxu0 %v807
    %1954 = vmatpush.xpose.msra.mxu0 %v799
    %1955 = vmatpush.xpose.msra.mxu0 %v791
    %1956 = vmatpush.xpose.msra.mxu0 %v783
    %1957 = vmatpush.xpose.msra.mxu0 %v775
    %1958 = vmatpush.xpose.msra.mxu0 %v767
    %1959 = vmatpush.xpose.msra.mxu0 %v759
    %1960 = vmatpush.xpose.msra.mxu0 %v751
    %1961 = vmatpush.xpose.msra.mxu0 %v743
    %1962 = vmatpush.xpose.msra.mxu0 %v735
    %1963 = vmatpush.xpose.msra.mxu0 %v727
    %1964 = vmatpush.xpose.msra.mxu0 %v719
    %1965 = vmatpush.xpose.msra.mxu0 %v711
    %1966 = vmatpush.xpose.msra.mxu0 %v703
    %1967 = vmatmul.f32.gmra.mxu0 %v1116
    %v1968 = vpop.f32.mrf.mxu0
    %v1969 = vadd.f32 %v1949, %v1968
    %1970 = vdwg.mxu0
    %1971 = vmatpush.xpose.msra.mxu0 %v824
    %1972 = vmatpush.xpose.msra.mxu0 %v816
    %1973 = vmatpush.xpose.msra.mxu0 %v808
    %1974 = vmatpush.xpose.msra.mxu0 %v800
    %1975 = vmatpush.xpose.msra.mxu0 %v792
    %1976 = vmatpush.xpose.msra.mxu0 %v784
    %1977 = vmatpush.xpose.msra.mxu0 %v776
    %1978 = vmatpush.xpose.msra.mxu0 %v768
    %1979 = vmatpush.xpose.msra.mxu0 %v760
    %1980 = vmatpush.xpose.msra.mxu0 %v752
    %1981 = vmatpush.xpose.msra.mxu0 %v744
    %1982 = vmatpush.xpose.msra.mxu0 %v736
    %1983 = vmatpush.xpose.msra.mxu0 %v728
    %1984 = vmatpush.xpose.msra.mxu0 %v720
    %1985 = vmatpush.xpose.msra.mxu0 %v712
    %1986 = vmatpush.xpose.msra.mxu0 %v704
    %1987 = vmatmul.f32.gmra.mxu0 %v1117
    %v1988 = vpop.f32.mrf.mxu0
    %v1989 = vadd.f32 %v1969, %v1988
    %1990 = vdwg.mxu0
    %1991 = vmatpush.xpose.msra.mxu0 %v825
    %1992 = vmatpush.xpose.msra.mxu0 %v817
    %1993 = vmatpush.xpose.msra.mxu0 %v809
    %1994 = vmatpush.xpose.msra.mxu0 %v801
    %1995 = vmatpush.xpose.msra.mxu0 %v793
    %1996 = vmatpush.xpose.msra.mxu0 %v785
    %1997 = vmatpush.xpose.msra.mxu0 %v777
    %1998 = vmatpush.xpose.msra.mxu0 %v769
    %1999 = vmatpush.xpose.msra.mxu0 %v761
    %2000 = vmatpush.xpose.msra.mxu0 %v753
    %2001 = vmatpush.xpose.msra.mxu0 %v745
    %2002 = vmatpush.xpose.msra.mxu0 %v737
    %2003 = vmatpush.xpose.msra.mxu0 %v729
    %2004 = vmatpush.xpose.msra.mxu0 %v721
    %2005 = vmatpush.xpose.msra.mxu0 %v713
    %2006 = vmatpush.xpose.msra.mxu0 %v705
    %2007 = vmatmul.f32.gmra.mxu0 %v1118
    %v2008 = vpop.f32.mrf.mxu0
    %v2009 = vadd.f32 %v1989, %v2008
    %2010 = vdwg.mxu0
    %2011 = vmatpush.xpose.msra.mxu0 %v826
    %2012 = vmatpush.xpose.msra.mxu0 %v818
    %2013 = vmatpush.xpose.msra.mxu0 %v810
    %2014 = vmatpush.xpose.msra.mxu0 %v802
    %2015 = vmatpush.xpose.msra.mxu0 %v794
    %2016 = vmatpush.xpose.msra.mxu0 %v786
    %2017 = vmatpush.xpose.msra.mxu0 %v778
    %2018 = vmatpush.xpose.msra.mxu0 %v770
    %2019 = vmatpush.xpose.msra.mxu0 %v762
    %2020 = vmatpush.xpose.msra.mxu0 %v754
    %2021 = vmatpush.xpose.msra.mxu0 %v746
    %2022 = vmatpush.xpose.msra.mxu0 %v738
    %2023 = vmatpush.xpose.msra.mxu0 %v730
    %2024 = vmatpush.xpose.msra.mxu0 %v722
    %2025 = vmatpush.xpose.msra.mxu0 %v714
    %2026 = vmatpush.xpose.msra.mxu0 %v706
    %2027 = vmatmul.f32.gmra.mxu0 %v1119
    %v2028 = vpop.f32.mrf.mxu0
    %v2029 = vadd.f32 %v2009, %v2028
    %2030 = vdwg.mxu0
    %2031 = vmatpush.xpose.msra.mxu0 %v827
    %2032 = vmatpush.xpose.msra.mxu0 %v819
    %2033 = vmatpush.xpose.msra.mxu0 %v811
    %2034 = vmatpush.xpose.msra.mxu0 %v803
    %2035 = vmatpush.xpose.msra.mxu0 %v795
    %2036 = vmatpush.xpose.msra.mxu0 %v787
    %2037 = vmatpush.xpose.msra.mxu0 %v779
    %2038 = vmatpush.xpose.msra.mxu0 %v771
    %2039 = vmatpush.xpose.msra.mxu0 %v763
    %2040 = vmatpush.xpose.msra.mxu0 %v755
    %2041 = vmatpush.xpose.msra.mxu0 %v747
    %2042 = vmatpush.xpose.msra.mxu0 %v739
    %2043 = vmatpush.xpose.msra.mxu0 %v731
    %2044 = vmatpush.xpose.msra.mxu0 %v723
    %2045 = vmatpush.xpose.msra.mxu0 %v715
    %2046 = vmatpush.xpose.msra.mxu0 %v707
    %2047 = vmatmul.f32.gmra.mxu0 %v1120
    %v2048 = vpop.f32.mrf.mxu0
    %v2049 = vadd.f32 %v2029, %v2048
    %2050 = vdwg.mxu0
    %2051 = vmatpush.xpose.msra.mxu0 %v828
    %2052 = vmatpush.xpose.msra.mxu0 %v820
    %2053 = vmatpush.xpose.msra.mxu0 %v812
    %2054 = vmatpush.xpose.msra.mxu0 %v804
    %2055 = vmatpush.xpose.msra.mxu0 %v796
    %2056 = vmatpush.xpose.msra.mxu0 %v788
    %2057 = vmatpush.xpose.msra.mxu0 %v780
    %2058 = vmatpush.xpose.msra.mxu0 %v772
    %2059 = vmatpush.xpose.msra.mxu0 %v764
    %2060 = vmatpush.xpose.msra.mxu0 %v756
    %2061 = vmatpush.xpose.msra.mxu0 %v748
    %2062 = vmatpush.xpose.msra.mxu0 %v740
    %2063 = vmatpush.xpose.msra.mxu0 %v732
    %2064 = vmatpush.xpose.msra.mxu0 %v724
    %2065 = vmatpush.xpose.msra.mxu0 %v716
    %2066 = vmatpush.xpose.msra.mxu0 %v708
    %2067 = vmatmul.f32.gmra.mxu0 %v1121
    %v2068 = vpop.f32.mrf.mxu0
    %v2069 = vadd.f32 %v2049, %v2068
    %2070 = vdwg.mxu0
    %2071 = vmatpush.xpose.msra.mxu0 %v829
    %2072 = vmatpush.xpose.msra.mxu0 %v821
    %2073 = vmatpush.xpose.msra.mxu0 %v813
    %2074 = vmatpush.xpose.msra.mxu0 %v805
    %2075 = vmatpush.xpose.msra.mxu0 %v797
    %2076 = vmatpush.xpose.msra.mxu0 %v789
    %2077 = vmatpush.xpose.msra.mxu0 %v781
    %2078 = vmatpush.xpose.msra.mxu0 %v773
    %2079 = vmatpush.xpose.msra.mxu0 %v765
    %2080 = vmatpush.xpose.msra.mxu0 %v757
    %2081 = vmatpush.xpose.msra.mxu0 %v749
    %2082 = vmatpush.xpose.msra.mxu0 %v741
    %2083 = vmatpush.xpose.msra.mxu0 %v733
    %2084 = vmatpush.xpose.msra.mxu0 %v725
    %2085 = vmatpush.xpose.msra.mxu0 %v717
    %2086 = vmatpush.xpose.msra.mxu0 %v709
    %2087 = vmatmul.f32.gmra.mxu0 %v1122
    %v2088 = vpop.f32.mrf.mxu0
    %v2089 = vadd.f32 %v2069, %v2088
    %2090 = vdwg.mxu0
    %2091 = vmatpush.xpose.msra.mxu0 %v950
    %2092 = vmatpush.xpose.msra.mxu0 %v942
    %2093 = vmatpush.xpose.msra.mxu0 %v934
    %2094 = vmatpush.xpose.msra.mxu0 %v926
    %2095 = vmatpush.xpose.msra.mxu0 %v918
    %2096 = vmatpush.xpose.msra.mxu0 %v910
    %2097 = vmatpush.xpose.msra.mxu0 %v902
    %2098 = vmatpush.xpose.msra.mxu0 %v894
    %2099 = vmatpush.xpose.msra.mxu0 %v886
    %2100 = vmatpush.xpose.msra.mxu0 %v878
    %2101 = vmatpush.xpose.msra.mxu0 %v870
    %2102 = vmatpush.xpose.msra.mxu0 %v862
    %2103 = vmatpush.xpose.msra.mxu0 %v854
    %2104 = vmatpush.xpose.msra.mxu0 %v846
    %2105 = vmatpush.xpose.msra.mxu0 %v838
    %2106 = vmatpush.xpose.msra.mxu0 %v830
    %2107 = vmatmul.f32.gmra.mxu0 %v1115
    %v2108 = vpop.f32.mrf.mxu0
    %v2109 = vadd.f32 %v1094, %v2108
    %2110 = vdwg.mxu0
    %2111 = vmatpush.xpose.msra.mxu0 %v951
    %2112 = vmatpush.xpose.msra.mxu0 %v943
    %2113 = vmatpush.xpose.msra.mxu0 %v935
    %2114 = vmatpush.xpose.msra.mxu0 %v927
    %2115 = vmatpush.xpose.msra.mxu0 %v919
    %2116 = vmatpush.xpose.msra.mxu0 %v911
    %2117 = vmatpush.xpose.msra.mxu0 %v903
    %2118 = vmatpush.xpose.msra.mxu0 %v895
    %2119 = vmatpush.xpose.msra.mxu0 %v887
    %2120 = vmatpush.xpose.msra.mxu0 %v879
    %2121 = vmatpush.xpose.msra.mxu0 %v871
    %2122 = vmatpush.xpose.msra.mxu0 %v863
    %2123 = vmatpush.xpose.msra.mxu0 %v855
    %2124 = vmatpush.xpose.msra.mxu0 %v847
    %2125 = vmatpush.xpose.msra.mxu0 %v839
    %2126 = vmatpush.xpose.msra.mxu0 %v831
    %2127 = vmatmul.f32.gmra.mxu0 %v1116
    %v2128 = vpop.f32.mrf.mxu0
    %v2129 = vadd.f32 %v2109, %v2128
    %2130 = vdwg.mxu0
    %2131 = vmatpush.xpose.msra.mxu0 %v952
    %2132 = vmatpush.xpose.msra.mxu0 %v944
    %2133 = vmatpush.xpose.msra.mxu0 %v936
    %2134 = vmatpush.xpose.msra.mxu0 %v928
    %2135 = vmatpush.xpose.msra.mxu0 %v920
    %2136 = vmatpush.xpose.msra.mxu0 %v912
    %2137 = vmatpush.xpose.msra.mxu0 %v904
    %2138 = vmatpush.xpose.msra.mxu0 %v896
    %2139 = vmatpush.xpose.msra.mxu0 %v888
    %2140 = vmatpush.xpose.msra.mxu0 %v880
    %2141 = vmatpush.xpose.msra.mxu0 %v872
    %2142 = vmatpush.xpose.msra.mxu0 %v864
    %2143 = vmatpush.xpose.msra.mxu0 %v856
    %2144 = vmatpush.xpose.msra.mxu0 %v848
    %2145 = vmatpush.xpose.msra.mxu0 %v840
    %2146 = vmatpush.xpose.msra.mxu0 %v832
    %2147 = vmatmul.f32.gmra.mxu0 %v1117
    %v2148 = vpop.f32.mrf.mxu0
    %v2149 = vadd.f32 %v2129, %v2148
    %2150 = vdwg.mxu0
    %2151 = vmatpush.xpose.msra.mxu0 %v953
    %2152 = vmatpush.xpose.msra.mxu0 %v945
    %2153 = vmatpush.xpose.msra.mxu0 %v937
    %2154 = vmatpush.xpose.msra.mxu0 %v929
    %2155 = vmatpush.xpose.msra.mxu0 %v921
    %2156 = vmatpush.xpose.msra.mxu0 %v913
    %2157 = vmatpush.xpose.msra.mxu0 %v905
    %2158 = vmatpush.xpose.msra.mxu0 %v897
    %2159 = vmatpush.xpose.msra.mxu0 %v889
    %2160 = vmatpush.xpose.msra.mxu0 %v881
    %2161 = vmatpush.xpose.msra.mxu0 %v873
    %2162 = vmatpush.xpose.msra.mxu0 %v865
    %2163 = vmatpush.xpose.msra.mxu0 %v857
    %2164 = vmatpush.xpose.msra.mxu0 %v849
    %2165 = vmatpush.xpose.msra.mxu0 %v841
    %2166 = vmatpush.xpose.msra.mxu0 %v833
    %2167 = vmatmul.f32.gmra.mxu0 %v1118
    %v2168 = vpop.f32.mrf.mxu0
    %v2169 = vadd.f32 %v2149, %v2168
    %2170 = vdwg.mxu0
    %2171 = vmatpush.xpose.msra.mxu0 %v954
    %2172 = vmatpush.xpose.msra.mxu0 %v946
    %2173 = vmatpush.xpose.msra.mxu0 %v938
    %2174 = vmatpush.xpose.msra.mxu0 %v930
    %2175 = vmatpush.xpose.msra.mxu0 %v922
    %2176 = vmatpush.xpose.msra.mxu0 %v914
    %2177 = vmatpush.xpose.msra.mxu0 %v906
    %2178 = vmatpush.xpose.msra.mxu0 %v898
    %2179 = vmatpush.xpose.msra.mxu0 %v890
    %2180 = vmatpush.xpose.msra.mxu0 %v882
    %2181 = vmatpush.xpose.msra.mxu0 %v874
    %2182 = vmatpush.xpose.msra.mxu0 %v866
    %2183 = vmatpush.xpose.msra.mxu0 %v858
    %2184 = vmatpush.xpose.msra.mxu0 %v850
    %2185 = vmatpush.xpose.msra.mxu0 %v842
    %2186 = vmatpush.xpose.msra.mxu0 %v834
    %2187 = vmatmul.f32.gmra.mxu0 %v1119
    %v2188 = vpop.f32.mrf.mxu0
    %v2189 = vadd.f32 %v2169, %v2188
    %2190 = vdwg.mxu0
    %2191 = vmatpush.xpose.msra.mxu0 %v955
    %2192 = vmatpush.xpose.msra.mxu0 %v947
    %2193 = vmatpush.xpose.msra.mxu0 %v939
    %2194 = vmatpush.xpose.msra.mxu0 %v931
    %2195 = vmatpush.xpose.msra.mxu0 %v923
    %2196 = vmatpush.xpose.msra.mxu0 %v915
    %2197 = vmatpush.xpose.msra.mxu0 %v907
    %2198 = vmatpush.xpose.msra.mxu0 %v899
    %2199 = vmatpush.xpose.msra.mxu0 %v891
    %2200 = vmatpush.xpose.msra.mxu0 %v883
    %2201 = vmatpush.xpose.msra.mxu0 %v875
    %2202 = vmatpush.xpose.msra.mxu0 %v867
    %2203 = vmatpush.xpose.msra.mxu0 %v859
    %2204 = vmatpush.xpose.msra.mxu0 %v851
    %2205 = vmatpush.xpose.msra.mxu0 %v843
    %2206 = vmatpush.xpose.msra.mxu0 %v835
    %2207 = vmatmul.f32.gmra.mxu0 %v1120
    %v2208 = vpop.f32.mrf.mxu0
    %v2209 = vadd.f32 %v2189, %v2208
    %2210 = vdwg.mxu0
    %2211 = vmatpush.xpose.msra.mxu0 %v956
    %2212 = vmatpush.xpose.msra.mxu0 %v948
    %2213 = vmatpush.xpose.msra.mxu0 %v940
    %2214 = vmatpush.xpose.msra.mxu0 %v932
    %2215 = vmatpush.xpose.msra.mxu0 %v924
    %2216 = vmatpush.xpose.msra.mxu0 %v916
    %2217 = vmatpush.xpose.msra.mxu0 %v908
    %2218 = vmatpush.xpose.msra.mxu0 %v900
    %2219 = vmatpush.xpose.msra.mxu0 %v892
    %2220 = vmatpush.xpose.msra.mxu0 %v884
    %2221 = vmatpush.xpose.msra.mxu0 %v876
    %2222 = vmatpush.xpose.msra.mxu0 %v868
    %2223 = vmatpush.xpose.msra.mxu0 %v860
    %2224 = vmatpush.xpose.msra.mxu0 %v852
    %2225 = vmatpush.xpose.msra.mxu0 %v844
    %2226 = vmatpush.xpose.msra.mxu0 %v836
    %2227 = vmatmul.f32.gmra.mxu0 %v1121
    %v2228 = vpop.f32.mrf.mxu0
    %v2229 = vadd.f32 %v2209, %v2228
    %2230 = vdwg.mxu0
    %2231 = vmatpush.xpose.msra.mxu0 %v957
    %2232 = vmatpush.xpose.msra.mxu0 %v949
    %2233 = vmatpush.xpose.msra.mxu0 %v941
    %2234 = vmatpush.xpose.msra.mxu0 %v933
    %2235 = vmatpush.xpose.msra.mxu0 %v925
    %2236 = vmatpush.xpose.msra.mxu0 %v917
    %2237 = vmatpush.xpose.msra.mxu0 %v909
    %2238 = vmatpush.xpose.msra.mxu0 %v901
    %2239 = vmatpush.xpose.msra.mxu0 %v893
    %2240 = vmatpush.xpose.msra.mxu0 %v885
    %2241 = vmatpush.xpose.msra.mxu0 %v877
    %2242 = vmatpush.xpose.msra.mxu0 %v869
    %2243 = vmatpush.xpose.msra.mxu0 %v861
    %2244 = vmatpush.xpose.msra.mxu0 %v853
    %2245 = vmatpush.xpose.msra.mxu0 %v845
    %2246 = vmatpush.xpose.msra.mxu0 %v837
    %2247 = vmatmul.f32.gmra.mxu0 %v1122
    %v2248 = vpop.f32.mrf.mxu0
    %v2249 = vadd.f32 %v2229, %v2248
    %2250 = vdwg.mxu0
    %2251 = vmatpush.xpose.msra.mxu0 %v1078
    %2252 = vmatpush.xpose.msra.mxu0 %v1070
    %2253 = vmatpush.xpose.msra.mxu0 %v1062
    %2254 = vmatpush.xpose.msra.mxu0 %v1054
    %2255 = vmatpush.xpose.msra.mxu0 %v1046
    %2256 = vmatpush.xpose.msra.mxu0 %v1038
    %2257 = vmatpush.xpose.msra.mxu0 %v1030
    %2258 = vmatpush.xpose.msra.mxu0 %v1022
    %2259 = vmatpush.xpose.msra.mxu0 %v1014
    %2260 = vmatpush.xpose.msra.mxu0 %v1006
    %2261 = vmatpush.xpose.msra.mxu0 %v998
    %2262 = vmatpush.xpose.msra.mxu0 %v990
    %2263 = vmatpush.xpose.msra.mxu0 %v982
    %2264 = vmatpush.xpose.msra.mxu0 %v974
    %2265 = vmatpush.xpose.msra.mxu0 %v966
    %2266 = vmatpush.xpose.msra.mxu0 %v958
    %2267 = vmatmul.f32.gmra.mxu0 %v1115
    %v2268 = vpop.f32.mrf.mxu0
    %v2269 = vadd.f32 %v1095, %v2268
    %2270 = vdwg.mxu0
    %2271 = vmatpush.xpose.msra.mxu0 %v1079
    %2272 = vmatpush.xpose.msra.mxu0 %v1071
    %2273 = vmatpush.xpose.msra.mxu0 %v1063
    %2274 = vmatpush.xpose.msra.mxu0 %v1055
    %2275 = vmatpush.xpose.msra.mxu0 %v1047
    %2276 = vmatpush.xpose.msra.mxu0 %v1039
    %2277 = vmatpush.xpose.msra.mxu0 %v1031
    %2278 = vmatpush.xpose.msra.mxu0 %v1023
    %2279 = vmatpush.xpose.msra.mxu0 %v1015
    %2280 = vmatpush.xpose.msra.mxu0 %v1007
    %2281 = vmatpush.xpose.msra.mxu0 %v999
    %2282 = vmatpush.xpose.msra.mxu0 %v991
    %2283 = vmatpush.xpose.msra.mxu0 %v983
    %2284 = vmatpush.xpose.msra.mxu0 %v975
    %2285 = vmatpush.xpose.msra.mxu0 %v967
    %2286 = vmatpush.xpose.msra.mxu0 %v959
    %2287 = vmatmul.f32.gmra.mxu0 %v1116
    %v2288 = vpop.f32.mrf.mxu0
    %v2289 = vadd.f32 %v2269, %v2288
    %2290 = vdwg.mxu0
    %2291 = vmatpush.xpose.msra.mxu0 %v1080
    %2292 = vmatpush.xpose.msra.mxu0 %v1072
    %2293 = vmatpush.xpose.msra.mxu0 %v1064
    %2294 = vmatpush.xpose.msra.mxu0 %v1056
    %2295 = vmatpush.xpose.msra.mxu0 %v1048
    %2296 = vmatpush.xpose.msra.mxu0 %v1040
    %2297 = vmatpush.xpose.msra.mxu0 %v1032
    %2298 = vmatpush.xpose.msra.mxu0 %v1024
    %2299 = vmatpush.xpose.msra.mxu0 %v1016
    %2300 = vmatpush.xpose.msra.mxu0 %v1008
    %2301 = vmatpush.xpose.msra.mxu0 %v1000
    %2302 = vmatpush.xpose.msra.mxu0 %v992
    %2303 = vmatpush.xpose.msra.mxu0 %v984
    %2304 = vmatpush.xpose.msra.mxu0 %v976
    %2305 = vmatpush.xpose.msra.mxu0 %v968
    %2306 = vmatpush.xpose.msra.mxu0 %v960
    %2307 = vmatmul.f32.gmra.mxu0 %v1117
    %v2308 = vpop.f32.mrf.mxu0
    %v2309 = vadd.f32 %v2289, %v2308
    %2310 = vdwg.mxu0
    %2311 = vmatpush.xpose.msra.mxu0 %v1081
    %2312 = vmatpush.xpose.msra.mxu0 %v1073
    %2313 = vmatpush.xpose.msra.mxu0 %v1065
    %2314 = vmatpush.xpose.msra.mxu0 %v1057
    %2315 = vmatpush.xpose.msra.mxu0 %v1049
    %2316 = vmatpush.xpose.msra.mxu0 %v1041
    %2317 = vmatpush.xpose.msra.mxu0 %v1033
    %2318 = vmatpush.xpose.msra.mxu0 %v1025
    %2319 = vmatpush.xpose.msra.mxu0 %v1017
    %2320 = vmatpush.xpose.msra.mxu0 %v1009
    %2321 = vmatpush.xpose.msra.mxu0 %v1001
    %2322 = vmatpush.xpose.msra.mxu0 %v993
    %2323 = vmatpush.xpose.msra.mxu0 %v985
    %2324 = vmatpush.xpose.msra.mxu0 %v977
    %2325 = vmatpush.xpose.msra.mxu0 %v969
    %2326 = vmatpush.xpose.msra.mxu0 %v961
    %2327 = vmatmul.f32.gmra.mxu0 %v1118
    %v2328 = vpop.f32.mrf.mxu0
    %v2329 = vadd.f32 %v2309, %v2328
    %2330 = vdwg.mxu0
    %2331 = vmatpush.xpose.msra.mxu0 %v1082
    %2332 = vmatpush.xpose.msra.mxu0 %v1074
    %2333 = vmatpush.xpose.msra.mxu0 %v1066
    %2334 = vmatpush.xpose.msra.mxu0 %v1058
    %2335 = vmatpush.xpose.msra.mxu0 %v1050
    %2336 = vmatpush.xpose.msra.mxu0 %v1042
    %2337 = vmatpush.xpose.msra.mxu0 %v1034
    %2338 = vmatpush.xpose.msra.mxu0 %v1026
    %2339 = vmatpush.xpose.msra.mxu0 %v1018
    %2340 = vmatpush.xpose.msra.mxu0 %v1010
    %2341 = vmatpush.xpose.msra.mxu0 %v1002
    %2342 = vmatpush.xpose.msra.mxu0 %v994
    %2343 = vmatpush.xpose.msra.mxu0 %v986
    %2344 = vmatpush.xpose.msra.mxu0 %v978
    %2345 = vmatpush.xpose.msra.mxu0 %v970
    %2346 = vmatpush.xpose.msra.mxu0 %v962
    %2347 = vmatmul.f32.gmra.mxu0 %v1119
    %v2348 = vpop.f32.mrf.mxu0
    %v2349 = vadd.f32 %v2329, %v2348
    %2350 = vdwg.mxu0
    %2351 = vmatpush.xpose.msra.mxu0 %v1083
    %2352 = vmatpush.xpose.msra.mxu0 %v1075
    %2353 = vmatpush.xpose.msra.mxu0 %v1067
    %2354 = vmatpush.xpose.msra.mxu0 %v1059
    %2355 = vmatpush.xpose.msra.mxu0 %v1051
    %2356 = vmatpush.xpose.msra.mxu0 %v1043
    %2357 = vmatpush.xpose.msra.mxu0 %v1035
    %2358 = vmatpush.xpose.msra.mxu0 %v1027
    %2359 = vmatpush.xpose.msra.mxu0 %v1019
    %2360 = vmatpush.xpose.msra.mxu0 %v1011
    %2361 = vmatpush.xpose.msra.mxu0 %v1003
    %2362 = vmatpush.xpose.msra.mxu0 %v995
    %2363 = vmatpush.xpose.msra.mxu0 %v987
    %2364 = vmatpush.xpose.msra.mxu0 %v979
    %2365 = vmatpush.xpose.msra.mxu0 %v971
    %2366 = vmatpush.xpose.msra.mxu0 %v963
    %2367 = vmatmul.f32.gmra.mxu0 %v1120
    %v2368 = vpop.f32.mrf.mxu0
    %v2369 = vadd.f32 %v2349, %v2368
    %2370 = vdwg.mxu0
    %2371 = vmatpush.xpose.msra.mxu0 %v1084
    %2372 = vmatpush.xpose.msra.mxu0 %v1076
    %2373 = vmatpush.xpose.msra.mxu0 %v1068
    %2374 = vmatpush.xpose.msra.mxu0 %v1060
    %2375 = vmatpush.xpose.msra.mxu0 %v1052
    %2376 = vmatpush.xpose.msra.mxu0 %v1044
    %2377 = vmatpush.xpose.msra.mxu0 %v1036
    %2378 = vmatpush.xpose.msra.mxu0 %v1028
    %2379 = vmatpush.xpose.msra.mxu0 %v1020
    %2380 = vmatpush.xpose.msra.mxu0 %v1012
    %2381 = vmatpush.xpose.msra.mxu0 %v1004
    %2382 = vmatpush.xpose.msra.mxu0 %v996
    %2383 = vmatpush.xpose.msra.mxu0 %v988
    %2384 = vmatpush.xpose.msra.mxu0 %v980
    %2385 = vmatpush.xpose.msra.mxu0 %v972
    %2386 = vmatpush.xpose.msra.mxu0 %v964
    %2387 = vmatmul.f32.gmra.mxu0 %v1121
    %v2388 = vpop.f32.mrf.mxu0
    %v2389 = vadd.f32 %v2369, %v2388
    %2390 = vdwg.mxu0
    %2391 = vmatpush.xpose.msra.mxu0 %v1085
    %2392 = vmatpush.xpose.msra.mxu0 %v1077
    %2393 = vmatpush.xpose.msra.mxu0 %v1069
    %2394 = vmatpush.xpose.msra.mxu0 %v1061
    %2395 = vmatpush.xpose.msra.mxu0 %v1053
    %2396 = vmatpush.xpose.msra.mxu0 %v1045
    %2397 = vmatpush.xpose.msra.mxu0 %v1037
    %2398 = vmatpush.xpose.msra.mxu0 %v1029
    %2399 = vmatpush.xpose.msra.mxu0 %v1021
    %2400 = vmatpush.xpose.msra.mxu0 %v1013
    %2401 = vmatpush.xpose.msra.mxu0 %v1005
    %2402 = vmatpush.xpose.msra.mxu0 %v997
    %2403 = vmatpush.xpose.msra.mxu0 %v989
    %2404 = vmatpush.xpose.msra.mxu0 %v981
    %2405 = vmatpush.xpose.msra.mxu0 %v973
    %2406 = vmatpush.xpose.msra.mxu0 %v965
    %2407 = vmatmul.f32.gmra.mxu0 %v1122
    %v2408 = vpop.f32.mrf.mxu0
    %v2409 = vadd.f32 %v2389, %v2408
    %2410 = vdwg.mxu0
    %v2419 = vrot.slane %v1449, 4
    %v2420 = vrot.slane %v1769, 4
    %v2421 = vrot.slane %v2089, 4
    %v2422 = vrot.slane %v2409, 4
    %vm2423 = vcmask 1043456
    %v2424 = vsel %vm2423, %v1289, %v2419
    %v2425 = vsel %vm2423, %v1609, %v2420
    %v2426 = vsel %vm2423, %v1929, %v2421
    %v2427 = vsel %vm2423, %v2249, %v2422
    %2432 = vst [vmem:[#allocation8] sm:$0xff] %v2424
    %2433 = vst [vmem:[#allocation8 + $0x8] sm:$0xff] %v2425
    %2434 = vst [vmem:[#allocation8 + $0x10] sm:$0xff] %v2426
    %2435 = vst [vmem:[#allocation8 + $0x18] sm:$0xff] %v2427
    // Predicated region
    $region26: #{tpu_custom_call.1} parent=1 // pred_check
      _
    $region27: #{tpu_custom_call.1} parent=1 // pred_check_branch
      %2437 = sbr.rel (0) target = $region29
    $region28: #{tpu_custom_call.1} parent=1 // pred_region
      %2439 = vsyncadd [#allocation4], 0
      %s2441 = sshll.u32 [#allocation8], 4
      %s2442 = int_to_ptr.vmem [resolvable:$true] %s2441
      %s2443 = sshll.u32 %s3, 4
      %s2444 = int_to_ptr.hbm [resolvable:$true] %s2443
      %2446 = dma.vmem_to_hbm [thread:$0]  %s2442, 512, %s2444, [#allocation4]
    $region29: #{tpu_custom_call.1} parent=1 // pred_fallthru
      _
    // Predicated region
    $region30: #{tpu_custom_call.1} parent=1 // pred_check
      _
    $region31: #{tpu_custom_call.1} parent=1 // pred_check_branch
      %2448 = sbr.rel (0) target = $region33
    $region32: #{tpu_custom_call.1} parent=1 // pred_region
      %2450 = dma.done [#allocation4], 512
    $region33: #{tpu_custom_call.1} parent=1 // pred_fallthru
      _
    %2451 = vsyncpa [#allocation3], 1
    %2452 = vsyncpa [#allocation6], 1
    %2453 = vsyncpa [#allocation4], 1

</llo_original>
